<compile_context>
chip_gen: v7x
topology: tpu7x:2x2x1
jax: 0.10.0
libtpu: 0.0.40
codegen_flags: <defaults>
</compile_context>

<pallas_src>
import functools

import jax
import jax.numpy as jnp
import numpy as np
from jax.experimental import pallas as pl
from jax.experimental.pallas import tpu as pltpu

_NEG_INF = -1e30


def _self_attention_kernel(x_ref, xt_ref, wqv_ref, bqv_ref, wkt_ref, bk_ref,
                           o_ref, q_sc, v_sc, *, scale, a_pad, l_real, l_pad,
                           block_l):
    li = pl.program_id(1)

    # ---- once per batch: fused query/value projection over the full sequence ----
    @pl.when(li == 0)
    def _init():
        qv = jnp.dot(wqv_ref[...], x_ref[...],
                     preferred_element_type=jnp.float32) + bqv_ref[...]  # (2A, L) f32
        q = qv[:a_pad] * scale          # fold 1/sqrt(A) into q: A*L mults, not L*L
        v = qv[a_pad:]
        if l_pad != l_real:
            col = jax.lax.broadcasted_iota(jnp.int32, (a_pad, l_pad), 1)
            v = jnp.where(col < l_real, v, 0.0)   # padded key positions contribute 0
        q_sc[...] = q.astype(jnp.bfloat16)
        v_sc[...] = v.astype(jnp.bfloat16)
        o_ref[...] = jnp.zeros_like(o_ref)        # accumulate straight into the output

    # ---- key projection for this key block, directly in (TL, A) layout (NN dot) ----
    key_t = (jnp.dot(xt_ref[...], wkt_ref[...],
                     preferred_element_type=jnp.float32) + bk_ref[...]
             ).astype(jnp.bfloat16)                                      # (TL, A)

    # ---- scores vs all query positions (scale already folded into q) ----
    att = jnp.dot(key_t, q_sc[...], preferred_element_type=jnp.float32)  # (TL, L) f32
    if l_pad != l_real:
        colm = jax.lax.broadcasted_iota(jnp.int32, (block_l, l_pad), 1)
        att = jnp.where(colm < l_real, att, _NEG_INF)  # mask padded query columns

    # exact per-row softmax over the query axis (rows are complete inside a block)
    m = jnp.max(att, axis=-1, keepdims=True)
    e = jnp.exp(att - m)
    inv = pl.reciprocal(jnp.sum(e, axis=-1, keepdims=True), approx=True)  # (TL, 1)
    att_map = (e * inv).astype(jnp.bfloat16)

    # ---- accumulate value @ att_map over key blocks, directly into o_ref (f32) ----
    off = pl.multiple_of(li * block_l, block_l)
    v_blk = v_sc[:, pl.ds(off, block_l)]                                  # (A, TL)
    o_ref[...] += jnp.dot(v_blk, att_map, preferred_element_type=jnp.float32)


def self_attention(x, wk, bk, wq, bq, wv, bv, att_features, *, block_l=512):
    """x: (B, C, L); w*: (A, C); b*: (A,). Returns (B, A, L) in x.dtype."""
    B, C, L = x.shape
    A = att_features
    out_dtype = x.dtype

    # lane/sublane-friendly padding; padded rows/cols are masked so math stays exact
    A_pad = max(128, ((A + 127) // 128) * 128)
    L_pad = ((L + 127) // 128) * 128

    def footprint(tl):
        """Rough VMEM bytes for one grid step (double buffers + scratch + temps)."""
        f = 2 * C * L_pad * 2                      # resident x block (bf16), 2 buffers
        f += 2 * tl * C * 2                        # xt key block (bf16), 2 buffers
        f += 2 * (2 * A_pad * C * 2 + 2 * A_pad * 4 + C * A_pad * 2 + A_pad * 4)
        f += 2 * A_pad * L_pad * 4                 # output block (f32), 2 buffers
        f += 2 * A_pad * L_pad * 2                 # q / v scratch (bf16)
        f += 2 * A_pad * L_pad * 4                 # init-time (2A, L) f32 temp
        f += tl * L_pad * 10                       # att/e f32 + bf16 att_map temps
        return f

    budget = 48 * 1024 * 1024                      # safe even on v7x's 64 MiB VMEM
    cap = max(128, (block_l // 128) * 128)
    TL = 128
    for cand in range(min(cap, L_pad), 127, -128):
        if L_pad % cand == 0 and footprint(cand) <= budget:
            TL = cand
            break
    NL = L_pad // TL
    vmem_limit = int(min(max(footprint(TL) * 1.3 + (4 << 20), 32 << 20), 64 << 20))

    # --- host-side (XLA) dtype / layout prep: bf16 inputs, pre-transposed views ---
    xb = x.astype(jnp.bfloat16)
    if L_pad != L:
        xb = jnp.pad(xb, ((0, 0), (0, 0), (0, L_pad - L)))
    xt = jnp.transpose(xb, (0, 2, 1))                      # (B, L_pad, C)

    def pad_w(w):
        return jnp.pad(w, ((0, A_pad - A), (0, 0)))

    def pad_b(b):
        return jnp.pad(b, ((0, A_pad - A),))

    w_qv = jnp.concatenate([pad_w(wq), pad_w(wv)], axis=0).astype(jnp.bfloat16)
    b_qv = jnp.concatenate([pad_b(bq), pad_b(bv)], axis=0).astype(jnp.float32)
    b_qv = b_qv.reshape(2 * A_pad, 1)
    w_kt = jnp.transpose(pad_w(wk)).astype(jnp.bfloat16)   # (C, A_pad)
    b_k = pad_b(bk).astype(jnp.float32).reshape(1, A_pad)
    scale = float(1.0 / np.sqrt(att_features))             # scale uses the REAL A

    kernel = functools.partial(_self_attention_kernel, scale=scale, a_pad=A_pad,
                               l_real=L, l_pad=L_pad, block_l=TL)

    out = pl.pallas_call(
        kernel,
        out_shape=jax.ShapeDtypeStruct((B, A_pad, L_pad), jnp.float32),
        grid_spec=pltpu.PrefetchScalarGridSpec(
            num_scalar_prefetch=0,
            grid=(B, NL),
            in_specs=[
                pl.BlockSpec((pl.Squeezed(), C, L_pad), lambda b, l: (b, 0, 0)),  # x (resident per batch)
                pl.BlockSpec((pl.Squeezed(), TL, C), lambda b, l: (b, l, 0)),     # x^T key block
                pl.BlockSpec((2 * A_pad, C), lambda b, l: (0, 0)),                # [Wq; Wv] bf16
                pl.BlockSpec((2 * A_pad, 1), lambda b, l: (0, 0)),                # [bq; bv] f32
                pl.BlockSpec((C, A_pad), lambda b, l: (0, 0)),                    # Wk^T bf16
                pl.BlockSpec((1, A_pad), lambda b, l: (0, 0)),                    # bk f32
            ],
            out_specs=pl.BlockSpec((pl.Squeezed(), A_pad, L_pad), lambda b, l: (b, 0, 0)),
            scratch_shapes=[
                pltpu.VMEM((A_pad, L_pad), jnp.bfloat16),   # scaled query
                pltpu.VMEM((A_pad, L_pad), jnp.bfloat16),   # value (padded cols zeroed)
            ],
        ),
        compiler_params=pltpu.CompilerParams(
            dimension_semantics=("parallel", "arbitrary"),
            vmem_limit_bytes=vmem_limit),
    )(xb, xt, w_qv, b_qv, w_kt, b_k)

    # strip the A / L padding; cast back to the input dtype
    return out[:, :A, :L].astype(out_dtype)


def self_attention_ref(x, wk, bk, wq, bq, wv, bv, att_features):
    """Pure-JAX reference mirroring the PyTorch forward exactly (f32 everywhere)."""
    key = jnp.einsum('oc,bcl->bol', wk, x) + bk[None, :, None]
    query = jnp.einsum('oc,bcl->bol', wq, x) + bq[None, :, None]
    value = jnp.einsum('oc,bcl->bol', wv, x) + bv[None, :, None]
    att = jnp.einsum('bal,bam->blm', key, query)  # key.transpose(-1,-2) @ query
    att_map = jax.nn.softmax(att / np.sqrt(att_features), axis=-1)
    return jnp.einsum('bal,blm->bam', value, att_map)


if __name__ == "__main__":
    # small shapes: batch=2, features=4, att_features=8; L=256 (aligned) and
    # L=200 (exercises the pad-to-128 + mask path).  block_l=128 -> 2 key blocks,
    # exercising the output-accumulation path too.
    B, C, A = 2, 4, 8
    key0 = jax.random.PRNGKey(0)
    kx, kwk, kbk, kwq, kbq, kwv, kbv = jax.random.split(key0, 7)

    wk = jax.random.normal(kwk, (A, C), dtype=jnp.float32) * 0.1
    bk = jax.random.normal(kbk, (A,), dtype=jnp.float32) * 0.1
    wq = jax.random.normal(kwq, (A, C), dtype=jnp.float32) * 0.1
    bq = jax.random.normal(kbq, (A,), dtype=jnp.float32) * 0.1
    wv = jax.random.normal(kwv, (A, C), dtype=jnp.float32) * 0.1
    bv = jax.random.normal(kbv, (A,), dtype=jnp.float32) * 0.1

    for L in (256, 200):
        x = jax.random.normal(kx, (B, C, L), dtype=jnp.float32)
        out = self_attention(x, wk, bk, wq, bq, wv, bv, A, block_l=128)
        out = jax.block_until_ready(out)
        ref = self_attention_ref(x, wk, bk, wq, bq, wv, bv, A)
        # bf16 MXU operands + approx reciprocal -> loosened tolerance vs f32 reference
        np.testing.assert_allclose(np.asarray(out), np.asarray(ref),
                                   rtol=2e-2, atol=2e-2)

    print("KERNEL_OK")
</pallas_src>

<mosaic_0001>
module attributes {stable_mosaic.version = 11 : i64} {
  func.func @_self_attention_kernel(%arg0: i32, %arg1: i32, %arg2: memref<1x4x256xbf16, #tpu.memory_space<vmem>>, %arg3: memref<1x128x4xbf16, #tpu.memory_space<vmem>>, %arg4: memref<256x4xbf16, #tpu.memory_space<vmem>>, %arg5: memref<256x1xf32, #tpu.memory_space<vmem>>, %arg6: memref<4x128xbf16, #tpu.memory_space<vmem>>, %arg7: memref<1x128xf32, #tpu.memory_space<vmem>>, %arg8: memref<1x128x256xf32, #tpu.memory_space<vmem>>, %arg9: memref<128x256xbf16, #tpu.memory_space<vmem>>, %arg10: memref<128x256xbf16, #tpu.memory_space<vmem>>) attributes {dimension_semantics = [#tpu.dimension_semantics<parallel>, #tpu.dimension_semantics<arbitrary>], iteration_bounds = array<i64: 2, 2>, scalar_prefetch = 0 : i64, scratch_operands = 2 : i64, tpu.core_type = #tpu.core_type<tc>, window_params = [{transform_indices = @transform_0, window_bounds = array<i64: 1, 4, 256>}, {transform_indices = @transform_1, window_bounds = array<i64: 1, 128, 4>}, {pipeline_mode = #tpu.pipeline_mode<synchronous>, transform_indices = @transform_2, window_bounds = array<i64: 256, 4>}, {pipeline_mode = #tpu.pipeline_mode<synchronous>, transform_indices = @transform_3, window_bounds = array<i64: 256, 1>}, {pipeline_mode = #tpu.pipeline_mode<synchronous>, transform_indices = @transform_4, window_bounds = array<i64: 4, 128>}, {pipeline_mode = #tpu.pipeline_mode<synchronous>, transform_indices = @transform_5, window_bounds = array<i64: 1, 128>}, {transform_indices = @transform_6, window_bounds = array<i64: 1, 128, 256>}]} {
    %c0_i32 = arith.constant 0 : i32
    %0 = arith.cmpi eq, %arg1, %c0_i32 : i32
    %1 = arith.extui %0 : i1 to i32
    %c0_i32_0 = arith.constant 0 : i32
    %2 = arith.cmpi ne, %1, %c0_i32_0 : i32
    scf.if %2 {
      %c0_20 = arith.constant 0 : index
      %c0_21 = arith.constant 0 : index
      %35 = vector.load %arg4[%c0_20, %c0_21] : memref<256x4xbf16, #tpu.memory_space<vmem>>, vector<256x4xbf16>
      %c0_22 = arith.constant 0 : index
      %c0_23 = arith.constant 0 : index
      %c0_24 = arith.constant 0 : index
      %36 = vector.load %arg2[%c0_22, %c0_23, %c0_24] : memref<1x4x256xbf16, #tpu.memory_space<vmem>>, vector<1x4x256xbf16>
      %37 = vector.shape_cast %36 : vector<1x4x256xbf16> to vector<4x256xbf16>
      %cst_25 = arith.constant dense<0.000000e+00> : vector<256x256xf32>
      %38 = tpu.matmul %35, %37, %cst_25 {dimension_numbers = #tpu.dot_dimension_numbers<[1], [0], [0], [1], [0, 0, 1, 1], [], []>} : vector<256x4xbf16>, vector<4x256xbf16>, vector<256x256xf32> -> vector<256x256xf32>
      %c0_26 = arith.constant 0 : index
      %c0_27 = arith.constant 0 : index
      %39 = vector.load %arg5[%c0_26, %c0_27] : memref<256x1xf32, #tpu.memory_space<vmem>>, vector<256x1xf32>
      %40 = vector.broadcast %39 : vector<256x1xf32> to vector<256x256xf32>
      %41 = arith.addf %38, %40 : vector<256x256xf32>
      %42 = vector.extract_strided_slice %41 {offsets = [0, 0], sizes = [128, 256], strides = [1, 1]} : vector<256x256xf32> to vector<128x256xf32>
      %cst_28 = arith.constant 0.353553385 : f32
      %43 = vector.broadcast %cst_28 : f32 to vector<128x256xf32>
      %44 = arith.mulf %42, %43 : vector<128x256xf32>
      %45 = vector.extract_strided_slice %41 {offsets = [128, 0], sizes = [128, 256], strides = [1, 1]} : vector<256x256xf32> to vector<128x256xf32>
      %46 = arith.truncf %44 : vector<128x256xf32> to vector<128x256xbf16>
      %c0_29 = arith.constant 0 : index
      %c0_30 = arith.constant 0 : index
      %47 = vector.load %arg9[%c0_29, %c0_30] : memref<128x256xbf16, #tpu.memory_space<vmem>>, vector<128x256xbf16>
      tpu.vector_store %arg9[%c0_29, %c0_30], %46 {strides = array<i32>} : memref<128x256xbf16, #tpu.memory_space<vmem>>, vector<128x256xbf16>,
      %48 = arith.truncf %45 : vector<128x256xf32> to vector<128x256xbf16>
      %c0_31 = arith.constant 0 : index
      %c0_32 = arith.constant 0 : index
      %49 = vector.load %arg10[%c0_31, %c0_32] : memref<128x256xbf16, #tpu.memory_space<vmem>>, vector<128x256xbf16>
      tpu.vector_store %arg10[%c0_31, %c0_32], %48 {strides = array<i32>} : memref<128x256xbf16, #tpu.memory_space<vmem>>, vector<128x256xbf16>,
      %cst_33 = arith.constant 0.000000e+00 : f32
      %50 = vector.broadcast %cst_33 : f32 to vector<128x256xf32>
      %c0_34 = arith.constant 0 : index
      %c0_35 = arith.constant 0 : index
      %c0_36 = arith.constant 0 : index
      %51 = vector.load %arg8[%c0_34, %c0_35, %c0_36] : memref<1x128x256xf32, #tpu.memory_space<vmem>>, vector<1x128x256xf32>
      %52 = vector.shape_cast %51 : vector<1x128x256xf32> to vector<128x256xf32>
      %53 = vector.shape_cast %50 : vector<128x256xf32> to vector<1x128x256xf32>
      tpu.vector_store %arg8[%c0_34, %c0_35, %c0_36], %53 {strides = array<i32>} : memref<1x128x256xf32, #tpu.memory_space<vmem>>, vector<1x128x256xf32>,
    } else {
    }
    %c0 = arith.constant 0 : index
    %c0_1 = arith.constant 0 : index
    %c0_2 = arith.constant 0 : index
    %3 = vector.load %arg3[%c0, %c0_1, %c0_2] : memref<1x128x4xbf16, #tpu.memory_space<vmem>>, vector<1x128x4xbf16>
    %4 = vector.shape_cast %3 : vector<1x128x4xbf16> to vector<128x4xbf16>
    %c0_3 = arith.constant 0 : index
    %c0_4 = arith.constant 0 : index
    %5 = vector.load %arg6[%c0_3, %c0_4] : memref<4x128xbf16, #tpu.memory_space<vmem>>, vector<4x128xbf16>
    %cst = arith.constant dense<0.000000e+00> : vector<128x128xf32>
    %6 = tpu.matmul %4, %5, %cst {dimension_numbers = #tpu.dot_dimension_numbers<[1], [0], [0], [1], [0, 0, 1, 1], [], []>} : vector<128x4xbf16>, vector<4x128xbf16>, vector<128x128xf32> -> vector<128x128xf32>
    %c0_5 = arith.constant 0 : index
    %c0_6 = arith.constant 0 : index
    %7 = vector.load %arg7[%c0_5, %c0_6] : memref<1x128xf32, #tpu.memory_space<vmem>>, vector<1x128xf32>
    %8 = vector.broadcast %7 : vector<1x128xf32> to vector<128x128xf32>
    %9 = arith.addf %6, %8 : vector<128x128xf32>
    %10 = arith.truncf %9 : vector<128x128xf32> to vector<128x128xbf16>
    %c0_7 = arith.constant 0 : index
    %c0_8 = arith.constant 0 : index
    %11 = vector.load %arg9[%c0_7, %c0_8] : memref<128x256xbf16, #tpu.memory_space<vmem>>, vector<128x256xbf16>
    %cst_9 = arith.constant dense<0.000000e+00> : vector<128x256xf32>
    %12 = tpu.matmul %10, %11, %cst_9 {dimension_numbers = #tpu.dot_dimension_numbers<[1], [0], [0], [1], [0, 0, 1, 1], [], []>} : vector<128x128xbf16>, vector<128x256xbf16>, vector<128x256xf32> -> vector<128x256xf32>
    %cst_10 = arith.constant dense<0xFF800000> : vector<128xf32>
    %13 = vector.multi_reduction <maximumf>, %12, %cst_10 [1] : vector<128x256xf32> to vector<128xf32>
    %14 = vector.shape_cast %13 : vector<128xf32> to vector<128x1xf32>
    %15 = vector.broadcast %14 : vector<128x1xf32> to vector<128x256xf32>
    %16 = arith.subf %12, %15 : vector<128x256xf32>
    %17 = math.exp %16 : vector<128x256xf32>
    %cst_11 = arith.constant dense<0.000000e+00> : vector<128xf32>
    %18 = vector.multi_reduction <add>, %17, %cst_11 [1] : vector<128x256xf32> to vector<128xf32>
    %19 = vector.shape_cast %18 : vector<128xf32> to vector<128x1xf32>
    %20 = tpu.reciprocal %19 {approx = true} : vector<128x1xf32> -> vector<128x1xf32>
    %21 = vector.broadcast %20 : vector<128x1xf32> to vector<128x256xf32>
    %22 = arith.mulf %17, %21 : vector<128x256xf32>
    %23 = arith.truncf %22 : vector<128x256xf32> to vector<128x256xbf16>
    %c128_i32 = arith.constant 128 : i32
    %24 = arith.muli %arg1, %c128_i32 : i32
    %25 = tpu.assume_multiple %24, 128 : i32
    %c0_12 = arith.constant 0 : index
    %26 = arith.index_cast %25 : i32 to index
    %27 = vector.load %arg10[%c0_12, %26] : memref<128x256xbf16, #tpu.memory_space<vmem>>, vector<128x128xbf16>
    %c0_13 = arith.constant 0 : index
    %c0_14 = arith.constant 0 : index
    %c0_15 = arith.constant 0 : index
    %28 = vector.load %arg8[%c0_13, %c0_14, %c0_15] : memref<1x128x256xf32, #tpu.memory_space<vmem>>, vector<1x128x256xf32>
    %29 = vector.shape_cast %28 : vector<1x128x256xf32> to vector<128x256xf32>
    %cst_16 = arith.constant dense<0.000000e+00> : vector<128x256xf32>
    %30 = tpu.matmul %27, %23, %cst_16 {dimension_numbers = #tpu.dot_dimension_numbers<[1], [0], [0], [1], [0, 0, 1, 1], [], []>} : vector<128x128xbf16>, vector<128x256xbf16>, vector<128x256xf32> -> vector<128x256xf32>
    %31 = arith.addf %29, %30 : vector<128x256xf32>
    %c0_17 = arith.constant 0 : index
    %c0_18 = arith.constant 0 : index
    %c0_19 = arith.constant 0 : index
    %32 = vector.load %arg8[%c0_17, %c0_18, %c0_19] : memref<1x128x256xf32, #tpu.memory_space<vmem>>, vector<1x128x256xf32>
    %33 = vector.shape_cast %32 : vector<1x128x256xf32> to vector<128x256xf32>
    %34 = vector.shape_cast %31 : vector<128x256xf32> to vector<1x128x256xf32>
    tpu.vector_store %arg8[%c0_17, %c0_18, %c0_19], %34 {strides = array<i32>} : memref<1x128x256xf32, #tpu.memory_space<vmem>>, vector<1x128x256xf32>,
    return
  }
  func.func @transform_0(%arg0: i32, %arg1: i32) -> (i32, i32, i32) {
    %c0_i32 = arith.constant 0 : i32
    %c0_i32_0 = arith.constant 0 : i32
    %c0_i32_1 = arith.constant 0 : i32
    return %arg0, %c0_i32, %c0_i32_0 : i32, i32, i32
  }
  func.func @transform_1(%arg0: i32, %arg1: i32) -> (i32, i32, i32) {
    %c0_i32 = arith.constant 0 : i32
    %c0_i32_0 = arith.constant 0 : i32
    return %arg0, %arg1, %c0_i32 : i32, i32, i32
  }
  func.func @transform_2(%arg0: i32, %arg1: i32) -> (i32, i32) {
    %c0_i32 = arith.constant 0 : i32
    %c0_i32_0 = arith.constant 0 : i32
    %c0_i32_1 = arith.constant 0 : i32
    return %c0_i32, %c0_i32_0 : i32, i32
  }
  func.func @transform_3(%arg0: i32, %arg1: i32) -> (i32, i32) {
    %c0_i32 = arith.constant 0 : i32
    %c0_i32_0 = arith.constant 0 : i32
    %c0_i32_1 = arith.constant 0 : i32
    return %c0_i32, %c0_i32_0 : i32, i32
  }
  func.func @transform_4(%arg0: i32, %arg1: i32) -> (i32, i32) {
    %c0_i32 = arith.constant 0 : i32
    %c0_i32_0 = arith.constant 0 : i32
    %c0_i32_1 = arith.constant 0 : i32
    return %c0_i32, %c0_i32_0 : i32, i32
  }
  func.func @transform_5(%arg0: i32, %arg1: i32) -> (i32, i32) {
    %c0_i32 = arith.constant 0 : i32
    %c0_i32_0 = arith.constant 0 : i32
    %c0_i32_1 = arith.constant 0 : i32
    return %c0_i32, %c0_i32_0 : i32, i32
  }
  func.func @transform_6(%arg0: i32, %arg1: i32) -> (i32, i32, i32) {
    %c0_i32 = arith.constant 0 : i32
    %c0_i32_0 = arith.constant 0 : i32
    %c0_i32_1 = arith.constant 0 : i32
    return %arg0, %c0_i32, %c0_i32_0 : i32, i32, i32
  }
}

</mosaic_0001>

<llo_original>
// kernel: tpu_custom_call.1
$region0: #{tpu_custom_call.1}
  #allocation0 [shape = 'u32[]', space=smem, size = 0x4, offset = 0x4, fixed_abs, tag = 'smem constant byte address 0x4 - core index']
  #allocation1 [shape = 'u32[144,128]{1,0:T(1,128)}', space=vmem, size = 0x12000, scoped, tag = 'internal scratch']
  #allocation2 [shape = 'bf16[128,256]{1,0:T(16,128)(2,1)}', space=vmem, size = 0x10000, scoped, tag = 'scratch operand']
  #allocation3 [shape = 'bf16[128,256]{1,0:T(16,128)(2,1)}', space=vmem, size = 0x10000, scoped, tag = 'scratch operand']
  %s0 = inlined_call_operand.vmem [shape: bf16[2,4,256], index: 0, kind: input, shape index: {}]
  %s1 = inlined_call_operand.vmem [shape: bf16[2,256,4], index: 1, kind: input, shape index: {}]
  %s2 = inlined_call_operand.vmem [shape: bf16[256,4], index: 2, kind: input, shape index: {}]
  %s3 = inlined_call_operand.vmem [shape: f32[256,1], index: 3, kind: input, shape index: {}]
  %s4 = inlined_call_operand.vmem [shape: bf16[4,128], index: 4, kind: input, shape index: {}]
  %s5 = inlined_call_operand.vmem [shape: f32[1,128], index: 5, kind: input, shape index: {}]
  %s6 = inlined_call_operand.hbm [shape: f32[2,128,256], index: 6, kind: output, shape index: {}]
  %s7 = sld [smem:[#allocation0]]
  $region61: #{tpu_custom_call.1} parent=0
    _
  %s9 = ssub.s32 1, %s7
  %s10 = scalar_select 0, %s9, %s7
  $region1: #{tpu_custom_call.1} parent=0
    #allocation4 [shape = 'u8[262144]{0}', space=vmem, size = 0x40000, scoped, tag = 'output window, operand 0']
    #allocation5 [shape = 's32[2]{0}', space=sflag, size = 0x8, scoped, tag = 'scoped memory for tpu_custom_call.1']
    %11 = vsyncpa [#allocation5], 0
    %s12 = scalar_lea.sflag [#allocation5], 1
    %13 = vsyncpa %s12, 0
    loop: start=0, step=1, limit=6
    $region2: #{tpu_custom_call.1} parent=1 // loop_pre_header
      _
    $region3: #{tpu_custom_call.1} parent=1 // loop_header
      %s15 = sphi 0, %s19
      %p16 = scmp.ge.s32.totalorder %s15, 6
      %s22 = sphi 0, %s34
      %s23 = sphi 0, %s30
      %s24 = sphi 0, %s22
      %s25 = sphi 0, %s23
      %s26 = sphi 0, %s24
      %s27 = sphi 0, %s25
      %s37 = sphi 0, %s39
      %s40 = sphi 0, %s37
      %s41 = sphi 0, %s40
      %s57 = sphi 0, %s41
      %s65 = sphi 0, %s67
      %s68 = sphi 0, %s65
      %s69 = sphi 0, %s68
      %s85 = sphi 0, %s69
      %s89 = sphi 0, %s89
      %s91 = sphi 0, %s89
      %s92 = sphi 0, %s91
      %s106 = sphi 0, %s92
      %s110 = sphi 0, %s110
      %s112 = sphi 0, %s110
      %s113 = sphi 0, %s112
      %s127 = sphi 0, %s113
      %s131 = sphi 0, %s131
      %s133 = sphi 0, %s131
      %s134 = sphi 0, %s133
      %s148 = sphi 0, %s134
      %s152 = sphi 0, %s152
      %s154 = sphi 0, %s152
      %s155 = sphi 0, %s154
      %s169 = sphi 0, %s155
      %s175 = sphi 0, %s177
      %s178 = sphi 0, %s175
      %s179 = sphi 0, %s178
      %s195 = sphi 0, %s179
    $region4: #{tpu_custom_call.1} parent=1 // loop_header_branch
      %18 = sbr.rel (%p16) target = $region8
    $region5: #{tpu_custom_call.1} parent=1 // loop_body
      %s20 = ssub.s32 %s15, 1
      %s21 = ssub.s32 %s15, 2
      %s28 = sadd.s32 1, %s23
      %p29 = scmp.ge.s32.totalorder %s28, 2
      %s30 = scalar_select %p29, 0, %s28
      %s31 = sadd.s32 1, %s22
      %s32 = scalar_select %p29, %s31, %s22
      %p33 = scmp.ge.s32.totalorder %s32, 2
      %s34 = scalar_select %p33, 0, %s32
      %s35 = ssub.s32 %s22, %s34
      %p36 = scmp.eq.s32.totalorder %s35, 0
      %s38 = sadd.s32 %s37, 1
      %s39 = scalar_select %p36, %s37, %s38
      %p42 = pneg %p36
      %p43 = scmp.eq.s32.totalorder %s15, 3
      %p44 = por %p42, %p43
      %p45 = scmp.ne.s32.totalorder %s37, %s40
      %p46 = scmp.eq.s32.totalorder %s15, 0
      %p47 = por %p45, %p46
      %p48 = scmp.ne.s32.totalorder %s37, %s40
      %p49 = scmp.eq.s32.totalorder %s20, 3
      %p50 = por %p48, %p49
      %p51 = scmp.ne.s32.totalorder %s40, %s41
      %p52 = scmp.eq.s32.totalorder %s20, 0
      %p53 = por %p51, %p52
      %p54 = scmp.ne.s32.totalorder %s40, %s41
      %p55 = scmp.eq.s32.totalorder %s21, 3
      %p56 = por %p54, %p55
      %p58 = scmp.ne.s32.totalorder %s41, %s57
      %p59 = scmp.eq.s32.totalorder %s21, 0
      %p60 = por %p58, %p59
      %s61 = ssub.s32 %s22, %s34
      %s62 = ssub.s32 %s23, %s30
      %s63 = sor.u32 %s61, %s62
      %p64 = scmp.eq.s32.totalorder %s63, 0
      %s66 = sadd.s32 %s65, 1
      %s67 = scalar_select %p64, %s65, %s66
      %p70 = pneg %p64
      %p71 = scmp.eq.s32.totalorder %s15, 3
      %p72 = por %p70, %p71
      %p73 = scmp.ne.s32.totalorder %s65, %s68
      %p74 = scmp.eq.s32.totalorder %s15, 0
      %p75 = por %p73, %p74
      %p76 = scmp.ne.s32.totalorder %s65, %s68
      %p77 = scmp.eq.s32.totalorder %s20, 3
      %p78 = por %p76, %p77
      %p79 = scmp.ne.s32.totalorder %s68, %s69
      %p80 = scmp.eq.s32.totalorder %s20, 0
      %p81 = por %p79, %p80
      %p82 = scmp.ne.s32.totalorder %s68, %s69
      %p83 = scmp.eq.s32.totalorder %s21, 3
      %p84 = por %p82, %p83
      %p86 = scmp.ne.s32.totalorder %s69, %s85
      %p87 = scmp.eq.s32.totalorder %s21, 0
      %p88 = por %p86, %p87
      %s90 = sadd.s32 %s89, 1
      %p93 = scmp.eq.s32.totalorder %s15, 3
      %p94 = scmp.ne.s32.totalorder %s89, %s91
      %p95 = scmp.eq.s32.totalorder %s15, 0
      %p96 = por %p94, %p95
      %p97 = scmp.ne.s32.totalorder %s89, %s91
      %p98 = scmp.eq.s32.totalorder %s20, 3
      %p99 = por %p97, %p98
      %p100 = scmp.ne.s32.totalorder %s91, %s92
      %p101 = scmp.eq.s32.totalorder %s20, 0
      %p102 = por %p100, %p101
      %p103 = scmp.ne.s32.totalorder %s91, %s92
      %p104 = scmp.eq.s32.totalorder %s21, 3
      %p105 = por %p103, %p104
      %p107 = scmp.ne.s32.totalorder %s92, %s106
      %p108 = scmp.eq.s32.totalorder %s21, 0
      %p109 = por %p107, %p108
      %s111 = sadd.s32 %s110, 1
      %p114 = scmp.eq.s32.totalorder %s15, 3
      %p115 = scmp.ne.s32.totalorder %s110, %s112
      %p116 = scmp.eq.s32.totalorder %s15, 0
      %p117 = por %p115, %p116
      %p118 = scmp.ne.s32.totalorder %s110, %s112
      %p119 = scmp.eq.s32.totalorder %s20, 3
      %p120 = por %p118, %p119
      %p121 = scmp.ne.s32.totalorder %s112, %s113
      %p122 = scmp.eq.s32.totalorder %s20, 0
      %p123 = por %p121, %p122
      %p124 = scmp.ne.s32.totalorder %s112, %s113
      %p125 = scmp.eq.s32.totalorder %s21, 3
      %p126 = por %p124, %p125
      %p128 = scmp.ne.s32.totalorder %s113, %s127
      %p129 = scmp.eq.s32.totalorder %s21, 0
      %p130 = por %p128, %p129
      %s132 = sadd.s32 %s131, 1
      %p135 = scmp.eq.s32.totalorder %s15, 3
      %p136 = scmp.ne.s32.totalorder %s131, %s133
      %p137 = scmp.eq.s32.totalorder %s15, 0
      %p138 = por %p136, %p137
      %p139 = scmp.ne.s32.totalorder %s131, %s133
      %p140 = scmp.eq.s32.totalorder %s20, 3
      %p141 = por %p139, %p140
      %p142 = scmp.ne.s32.totalorder %s133, %s134
      %p143 = scmp.eq.s32.totalorder %s20, 0
      %p144 = por %p142, %p143
      %p145 = scmp.ne.s32.totalorder %s133, %s134
      %p146 = scmp.eq.s32.totalorder %s21, 3
      %p147 = por %p145, %p146
      %p149 = scmp.ne.s32.totalorder %s134, %s148
      %p150 = scmp.eq.s32.totalorder %s21, 0
      %p151 = por %p149, %p150
      %s153 = sadd.s32 %s152, 1
      %p156 = scmp.eq.s32.totalorder %s15, 3
      %p157 = scmp.ne.s32.totalorder %s152, %s154
      %p158 = scmp.eq.s32.totalorder %s15, 0
      %p159 = por %p157, %p158
      %p160 = scmp.ne.s32.totalorder %s152, %s154
      %p161 = scmp.eq.s32.totalorder %s20, 3
      %p162 = por %p160, %p161
      %p163 = scmp.ne.s32.totalorder %s154, %s155
      %p164 = scmp.eq.s32.totalorder %s20, 0
      %p165 = por %p163, %p164
      %p166 = scmp.ne.s32.totalorder %s154, %s155
      %p167 = scmp.eq.s32.totalorder %s21, 3
      %p168 = por %p166, %p167
      %p170 = scmp.ne.s32.totalorder %s155, %s169
      %p171 = scmp.eq.s32.totalorder %s21, 0
      %p172 = por %p170, %p171
      %s173 = ssub.s32 %s22, %s34
      %p174 = scmp.eq.s32.totalorder %s173, 0
      %s176 = sadd.s32 %s175, 1
      %s177 = scalar_select %p174, %s175, %s176
      %p180 = pneg %p174
      %p181 = scmp.eq.s32.totalorder %s15, 3
      %p182 = por %p180, %p181
      %p183 = scmp.ne.s32.totalorder %s175, %s178
      %p184 = scmp.eq.s32.totalorder %s15, 0
      %p185 = por %p183, %p184
      %p186 = scmp.ne.s32.totalorder %s175, %s178
      %p187 = scmp.eq.s32.totalorder %s20, 3
      %p188 = por %p186, %p187
      %p189 = scmp.ne.s32.totalorder %s178, %s179
      %p190 = scmp.eq.s32.totalorder %s20, 0
      %p191 = por %p189, %p190
      %p192 = scmp.ne.s32.totalorder %s178, %s179
      %p193 = scmp.eq.s32.totalorder %s21, 3
      %p194 = por %p192, %p193
      %p196 = scmp.ne.s32.totalorder %s179, %s195
      %p197 = scmp.eq.s32.totalorder %s21, 0
      %p198 = por %p196, %p197
      %p199 = scmp.le.s32.totalorder 1, %s15
      %p200 = scmp.lt.s32.totalorder %s15, 5
      %p201 = pnand %p199, %p200
      %p202 = pneg %p201
      // Predicated region
      $region9: #{tpu_custom_call.1} parent=5 // pred_check
        _
      $region10: #{tpu_custom_call.1} parent=5 // pred_check_branch
        %204 = sbr.rel (%p201) target = $region12
      $region11: #{tpu_custom_call.1} parent=5 // pred_region
        %s205 = ssub.s32 %s15, 1
        // Predicated region
        $region13: #{tpu_custom_call.1} parent=11 // pred_check
          %p206 = pneg %p102
        $region14: #{tpu_custom_call.1} parent=11 // pred_check_branch
          %208 = sbr.rel (%p206) target = $region16
        $region15: #{tpu_custom_call.1} parent=11 // pred_region
          _
        $region16: #{tpu_custom_call.1} parent=11 // pred_fallthru
          _
        // Predicated region
        $region17: #{tpu_custom_call.1} parent=11 // pred_check
          %p209 = pneg %p123
        $region18: #{tpu_custom_call.1} parent=11 // pred_check_branch
          %211 = sbr.rel (%p209) target = $region20
        $region19: #{tpu_custom_call.1} parent=11 // pred_region
          _
        $region20: #{tpu_custom_call.1} parent=11 // pred_fallthru
          _
        // Predicated region
        $region21: #{tpu_custom_call.1} parent=11 // pred_check
          %p212 = pneg %p144
        $region22: #{tpu_custom_call.1} parent=11 // pred_check_branch
          %214 = sbr.rel (%p212) target = $region24
        $region23: #{tpu_custom_call.1} parent=11 // pred_region
          _
        $region24: #{tpu_custom_call.1} parent=11 // pred_fallthru
          _
        // Predicated region
        $region25: #{tpu_custom_call.1} parent=11 // pred_check
          %p215 = pneg %p165
        $region26: #{tpu_custom_call.1} parent=11 // pred_check_branch
          %217 = sbr.rel (%p215) target = $region28
        $region27: #{tpu_custom_call.1} parent=11 // pred_region
          _
        $region28: #{tpu_custom_call.1} parent=11 // pred_fallthru
          _
      $region12: #{tpu_custom_call.1} parent=5 // pred_fallthru
        _
      %p218 = scmp.lt.s32.totalorder %s15, 4
      // Predicated region
      $region29: #{tpu_custom_call.1} parent=5 // pred_check
        %p219 = pneg %p218
      $region30: #{tpu_custom_call.1} parent=5 // pred_check_branch
        %221 = sbr.rel (%p219) target = $region32
      $region31: #{tpu_custom_call.1} parent=5 // pred_region
        // Predicated region
        $region33: #{tpu_custom_call.1} parent=31 // pred_check
          %p222 = pneg %p47
        $region34: #{tpu_custom_call.1} parent=31 // pred_check_branch
          %224 = sbr.rel (%p222) target = $region36
        $region35: #{tpu_custom_call.1} parent=31 // pred_region
          %p225 = scmp.lt.s32.totalorder %s22, 1
          %s226 = scalar_select %p225, %s22, 1
          %s227 = smul.addr %s226, 2
          %s228 = smul.addr %s227, 2
          %s229 = scalar_lea.vmem %s0, %s228
        $region36: #{tpu_custom_call.1} parent=31 // pred_fallthru
          _
        // Predicated region
        $region37: #{tpu_custom_call.1} parent=31 // pred_check
          %p230 = pneg %p75
        $region38: #{tpu_custom_call.1} parent=31 // pred_check_branch
          %232 = sbr.rel (%p230) target = $region40
        $region39: #{tpu_custom_call.1} parent=31 // pred_region
          %s233 = smul.u32 16, %s23
          %p234 = scmp.lt.s32.totalorder %s22, 1
          %s235 = scalar_select %p234, %s22, 1
          %p236 = scmp.lt.s32.totalorder %s233, 31
          %s237 = scalar_select %p236, %s233, 31
          %s238 = smul.addr %s235, 32
          %s239 = sadd.s32 %s237, %s238
          %s240 = smul.addr %s239, 4
          %s241 = scalar_lea.vmem %s1, %s240
          %s242 = smul.u32 16, %s23
        $region40: #{tpu_custom_call.1} parent=31 // pred_fallthru
          _
      $region32: #{tpu_custom_call.1} parent=5 // pred_fallthru
        _
      %p243 = scmp.le.s32.totalorder 1, %s15
      %p244 = scmp.lt.s32.totalorder %s15, 5
      %p245 = pnand %p243, %p244
      %p246 = pneg %p245
      // Predicated region
      $region41: #{tpu_custom_call.1} parent=5 // pred_check
        _
      $region42: #{tpu_custom_call.1} parent=5 // pred_check_branch
        %248 = sbr.rel (%p245) target = $region44
      $region43: #{tpu_custom_call.1} parent=5 // pred_region
        %s249 = ssub.s32 %s15, 1
        %p250 = scmp.lt.s32.totalorder %s24, 1
        %s251 = scalar_select %p250, %s24, 1
        %s252 = smul.addr %s251, 2
        %s253 = smul.addr %s252, 2
        %s254 = scalar_lea.vmem %s0, %s253
        %p255 = pneg %p53
        %p256 = pneg %p50
        %s257 = smul.u32 16, %s25
        %p258 = scmp.lt.s32.totalorder %s24, 1
        %s259 = scalar_select %p258, %s24, 1
        %p260 = scmp.lt.s32.totalorder %s257, 31
        %s261 = scalar_select %p260, %s257, 31
        %s262 = smul.addr %s259, 32
        %s263 = sadd.s32 %s261, %s262
        %s264 = smul.addr %s263, 4
        %s265 = scalar_lea.vmem %s1, %s264
        %p266 = pneg %p81
        %p267 = pneg %p78
        %p268 = pneg %p102
        %p269 = pneg %p99
        %p270 = pneg %p123
        %p271 = pneg %p120
        %p272 = pneg %p144
        %p273 = pneg %p141
        %p274 = pneg %p165
        %p275 = pneg %p162
        %p276 = pneg %p191
        %p277 = pneg %p188
        %s278 = sand.u32 %s178, 1
        %s279 = scalar_lea.sflag [#allocation5], %s278
        %s280 = sand.u32 %s178, 1
        %s281 = smul.addr %s280, 256
        %s282 = scalar_lea.vmem [#allocation4], %s281
        %p283 = scmp.lt.s32.totalorder %s24, 1
        %s284 = scalar_select %p283, %s24, 1
        %s285 = smul.addr %s284, 2
        %s286 = smul.addr %s285, 2
        %s287 = scalar_lea.vmem %s0, %s286
        %s288 = smul.u32 16, %s25
        %p289 = scmp.lt.s32.totalorder %s24, 1
        %s290 = scalar_select %p289, %s24, 1
        %p291 = scmp.lt.s32.totalorder %s288, 31
        %s292 = scalar_select %p291, %s288, 31
        %s293 = smul.addr %s290, 32
        %s294 = sadd.s32 %s292, %s293
        %s295 = smul.addr %s294, 4
        %s296 = scalar_lea.vmem %s1, %s295
        %s297 = smul.u32 16, %s25
        %p299 = scmp.eq.s32.totalorder %s25, 0
        // Predicated region
        $region45: #{tpu_custom_call.1} parent=43 // pred_check
          %p300 = pneg %p299
        $region46: #{tpu_custom_call.1} parent=43 // pred_check_branch
          %302 = sbr.rel (%p300) target = $region48
        $region47: #{tpu_custom_call.1} parent=43 // pred_region
          %v303 = vld [vmem:[%s2] sm:$0xf]
          %v304 = vld [vmem:[%s2 + $0x4] sm:$0xf]
          %v305 = vld [vmem:[%s2 + $0x8] sm:$0xf]
          %v306 = vld [vmem:[%s2 + $0xc] sm:$0xf]
          %v307 = vld [vmem:[%s2 + $0x10] sm:$0xf]
          %v308 = vld [vmem:[%s2 + $0x14] sm:$0xf]
          %v309 = vld [vmem:[%s2 + $0x18] sm:$0xf]
          %v310 = vld [vmem:[%s2 + $0x1c] sm:$0xf]
          %v311 = vld [vmem:[%s2 + $0x20] sm:$0xf]
          %v312 = vld [vmem:[%s2 + $0x24] sm:$0xf]
          %v313 = vld [vmem:[%s2 + $0x28] sm:$0xf]
          %v314 = vld [vmem:[%s2 + $0x2c] sm:$0xf]
          %v315 = vld [vmem:[%s2 + $0x30] sm:$0xf]
          %v316 = vld [vmem:[%s2 + $0x34] sm:$0xf]
          %v317 = vld [vmem:[%s2 + $0x38] sm:$0xf]
          %v318 = vld [vmem:[%s2 + $0x3c] sm:$0xf]
          %v319 = vld [vmem:[%s2 + $0x40] sm:$0xf]
          %v320 = vld [vmem:[%s2 + $0x44] sm:$0xf]
          %v321 = vld [vmem:[%s2 + $0x48] sm:$0xf]
          %v322 = vld [vmem:[%s2 + $0x4c] sm:$0xf]
          %v323 = vld [vmem:[%s2 + $0x50] sm:$0xf]
          %v324 = vld [vmem:[%s2 + $0x54] sm:$0xf]
          %v325 = vld [vmem:[%s2 + $0x58] sm:$0xf]
          %v326 = vld [vmem:[%s2 + $0x5c] sm:$0xf]
          %v327 = vld [vmem:[%s2 + $0x60] sm:$0xf]
          %v328 = vld [vmem:[%s2 + $0x64] sm:$0xf]
          %v329 = vld [vmem:[%s2 + $0x68] sm:$0xf]
          %v330 = vld [vmem:[%s2 + $0x6c] sm:$0xf]
          %v331 = vld [vmem:[%s2 + $0x70] sm:$0xf]
          %v332 = vld [vmem:[%s2 + $0x74] sm:$0xf]
          %v333 = vld [vmem:[%s2 + $0x78] sm:$0xf]
          %v334 = vld [vmem:[%s2 + $0x7c] sm:$0xf]
          %v335 = vld [vmem:[%s287] sm:$0xf]
          %v336 = vld [vmem:[%s3] sm:$0xff]
          %v337 = vld [vmem:[%s3 + $0x8] sm:$0xff]
          %v338 = vld [vmem:[%s3 + $0x10] sm:$0xff]
          %v339 = vld [vmem:[%s3 + $0x18] sm:$0xff]
          %v340 = vld [vmem:[%s3 + $0x20] sm:$0xff]
          %v341 = vld [vmem:[%s3 + $0x28] sm:$0xff]
          %v342 = vld [vmem:[%s3 + $0x30] sm:$0xff]
          %v343 = vld [vmem:[%s3 + $0x38] sm:$0xff]
          %v344 = vld [vmem:[%s3 + $0x40] sm:$0xff]
          %v345 = vld [vmem:[%s3 + $0x48] sm:$0xff]
          %v346 = vld [vmem:[%s3 + $0x50] sm:$0xff]
          %v347 = vld [vmem:[%s3 + $0x58] sm:$0xff]
          %v348 = vld [vmem:[%s3 + $0x60] sm:$0xff]
          %v349 = vld [vmem:[%s3 + $0x68] sm:$0xff]
          %v350 = vld [vmem:[%s3 + $0x70] sm:$0xff]
          %v351 = vld [vmem:[%s3 + $0x78] sm:$0xff]
          %v352 = vld [vmem:[%s3 + $0x80] sm:$0xff]
          %v353 = vld [vmem:[%s3 + $0x88] sm:$0xff]
          %v354 = vld [vmem:[%s3 + $0x90] sm:$0xff]
          %v355 = vld [vmem:[%s3 + $0x98] sm:$0xff]
          %v356 = vld [vmem:[%s3 + $0xa0] sm:$0xff]
          %v357 = vld [vmem:[%s3 + $0xa8] sm:$0xff]
          %v358 = vld [vmem:[%s3 + $0xb0] sm:$0xff]
          %v359 = vld [vmem:[%s3 + $0xb8] sm:$0xff]
          %v360 = vld [vmem:[%s3 + $0xc0] sm:$0xff]
          %v361 = vld [vmem:[%s3 + $0xc8] sm:$0xff]
          %v362 = vld [vmem:[%s3 + $0xd0] sm:$0xff]
          %v363 = vld [vmem:[%s3 + $0xd8] sm:$0xff]
          %v364 = vld [vmem:[%s3 + $0xe0] sm:$0xff]
          %v365 = vld [vmem:[%s3 + $0xe8] sm:$0xff]
          %v366 = vld [vmem:[%s3 + $0xf0] sm:$0xff]
          %v367 = vld [vmem:[%s3 + $0xf8] sm:$0xff]
          %369 = vset.pattern.permute.xlu0 0
          %370 = vperm.xlu0 %369, %v336
          %v371 = vpop.permute.xlu0 %370
          %374 = vset.pattern.permute.xlu0 0
          %375 = vperm.xlu0 %374, %v337
          %v376 = vpop.permute.xlu0 %375
          %379 = vset.pattern.permute.xlu0 0
          %380 = vperm.xlu0 %379, %v338
          %v381 = vpop.permute.xlu0 %380
          %384 = vset.pattern.permute.xlu0 0
          %385 = vperm.xlu0 %384, %v339
          %v386 = vpop.permute.xlu0 %385
          %389 = vset.pattern.permute.xlu0 0
          %390 = vperm.xlu0 %389, %v340
          %v391 = vpop.permute.xlu0 %390
          %394 = vset.pattern.permute.xlu0 0
          %395 = vperm.xlu0 %394, %v341
          %v396 = vpop.permute.xlu0 %395
          %399 = vset.pattern.permute.xlu0 0
          %400 = vperm.xlu0 %399, %v342
          %v401 = vpop.permute.xlu0 %400
          %404 = vset.pattern.permute.xlu0 0
          %405 = vperm.xlu0 %404, %v343
          %v406 = vpop.permute.xlu0 %405
          %409 = vset.pattern.permute.xlu0 0
          %410 = vperm.xlu0 %409, %v344
          %v411 = vpop.permute.xlu0 %410
          %414 = vset.pattern.permute.xlu0 0
          %415 = vperm.xlu0 %414, %v345
          %v416 = vpop.permute.xlu0 %415
          %419 = vset.pattern.permute.xlu0 0
          %420 = vperm.xlu0 %419, %v346
          %v421 = vpop.permute.xlu0 %420
          %424 = vset.pattern.permute.xlu0 0
          %425 = vperm.xlu0 %424, %v347
          %v426 = vpop.permute.xlu0 %425
          %429 = vset.pattern.permute.xlu0 0
          %430 = vperm.xlu0 %429, %v348
          %v431 = vpop.permute.xlu0 %430
          %434 = vset.pattern.permute.xlu0 0
          %435 = vperm.xlu0 %434, %v349
          %v436 = vpop.permute.xlu0 %435
          %439 = vset.pattern.permute.xlu0 0
          %440 = vperm.xlu0 %439, %v350
          %v441 = vpop.permute.xlu0 %440
          %444 = vset.pattern.permute.xlu0 0
          %445 = vperm.xlu0 %444, %v351
          %v446 = vpop.permute.xlu0 %445
          %449 = vset.pattern.permute.xlu0 0
          %450 = vperm.xlu0 %449, %v352
          %v451 = vpop.permute.xlu0 %450
          %454 = vset.pattern.permute.xlu0 0
          %455 = vperm.xlu0 %454, %v353
          %v456 = vpop.permute.xlu0 %455
          %459 = vset.pattern.permute.xlu0 0
          %460 = vperm.xlu0 %459, %v354
          %v461 = vpop.permute.xlu0 %460
          %464 = vset.pattern.permute.xlu0 0
          %465 = vperm.xlu0 %464, %v355
          %v466 = vpop.permute.xlu0 %465
          %469 = vset.pattern.permute.xlu0 0
          %470 = vperm.xlu0 %469, %v356
          %v471 = vpop.permute.xlu0 %470
          %474 = vset.pattern.permute.xlu0 0
          %475 = vperm.xlu0 %474, %v357
          %v476 = vpop.permute.xlu0 %475
          %479 = vset.pattern.permute.xlu0 0
          %480 = vperm.xlu0 %479, %v358
          %v481 = vpop.permute.xlu0 %480
          %484 = vset.pattern.permute.xlu0 0
          %485 = vperm.xlu0 %484, %v359
          %v486 = vpop.permute.xlu0 %485
          %489 = vset.pattern.permute.xlu0 0
          %490 = vperm.xlu0 %489, %v360
          %v491 = vpop.permute.xlu0 %490
          %494 = vset.pattern.permute.xlu0 0
          %495 = vperm.xlu0 %494, %v361
          %v496 = vpop.permute.xlu0 %495
          %499 = vset.pattern.permute.xlu0 0
          %500 = vperm.xlu0 %499, %v362
          %v501 = vpop.permute.xlu0 %500
          %504 = vset.pattern.permute.xlu0 0
          %505 = vperm.xlu0 %504, %v363
          %v506 = vpop.permute.xlu0 %505
          %509 = vset.pattern.permute.xlu0 0
          %510 = vperm.xlu0 %509, %v364
          %v511 = vpop.permute.xlu0 %510
          %514 = vset.pattern.permute.xlu0 0
          %515 = vperm.xlu0 %514, %v365
          %v516 = vpop.permute.xlu0 %515
          %519 = vset.pattern.permute.xlu0 0
          %520 = vperm.xlu0 %519, %v366
          %v521 = vpop.permute.xlu0 %520
          %524 = vset.pattern.permute.xlu0 0
          %525 = vperm.xlu0 %524, %v367
          %v526 = vpop.permute.xlu0 %525
          %v560 = vunpack.c.l.b16 %v303
          %v561 = vunpack.c.l.b16 %v304
          %v562 = vunpack.c.l.b16 %v305
          %v563 = vunpack.c.l.b16 %v306
          %v564 = vunpack.c.l.b16 %v307
          %v565 = vunpack.c.l.b16 %v308
          %v566 = vunpack.c.l.b16 %v309
          %v567 = vunpack.c.l.b16 %v310
          %v568 = vunpack.c.l.b16 %v311
          %v569 = vunpack.c.l.b16 %v312
          %v570 = vunpack.c.l.b16 %v313
          %v571 = vunpack.c.l.b16 %v314
          %v572 = vunpack.c.l.b16 %v315
          %v573 = vunpack.c.l.b16 %v316
          %v574 = vunpack.c.l.b16 %v317
          %v575 = vunpack.c.l.b16 %v318
          %v576 = vunpack.c.l.b16 %v319
          %v577 = vunpack.c.l.b16 %v320
          %v578 = vunpack.c.l.b16 %v321
          %v579 = vunpack.c.l.b16 %v322
          %v580 = vunpack.c.l.b16 %v323
          %v581 = vunpack.c.l.b16 %v324
          %v582 = vunpack.c.l.b16 %v325
          %v583 = vunpack.c.l.b16 %v326
          %v584 = vunpack.c.l.b16 %v327
          %v585 = vunpack.c.l.b16 %v328
          %v586 = vunpack.c.l.b16 %v329
          %v587 = vunpack.c.l.b16 %v330
          %v588 = vunpack.c.l.b16 %v331
          %v589 = vunpack.c.l.b16 %v332
          %v590 = vunpack.c.l.b16 %v333
          %v591 = vunpack.c.l.b16 %v334
          %v592 = vpack.c.b16 %v561, %v560
          %v593 = vpack.c.b16 %v563, %v562
          %v594 = vpack.c.b16 %v565, %v564
          %v595 = vpack.c.b16 %v567, %v566
          %v596 = vpack.c.b16 %v569, %v568
          %v597 = vpack.c.b16 %v571, %v570
          %v598 = vpack.c.b16 %v573, %v572
          %v599 = vpack.c.b16 %v575, %v574
          %v600 = vpack.c.b16 %v577, %v576
          %v601 = vpack.c.b16 %v579, %v578
          %v602 = vpack.c.b16 %v581, %v580
          %v603 = vpack.c.b16 %v583, %v582
          %v604 = vpack.c.b16 %v585, %v584
          %v605 = vpack.c.b16 %v587, %v586
          %v606 = vpack.c.b16 %v589, %v588
          %v607 = vpack.c.b16 %v591, %v590
          %v610 = vunpack.c.l.s4 1983009808
          %v611 = vunpack.c.0.s8 %v610
          %v612 = vlaneseq
          %v613 = vshrl.u32 %v612, 7
          %v614 = vsub.s32 %v611, %v613
          %v615 = vrot.slane %v335, %v614
          %v616 = vcombine.high %v615, %v615
          %vm617 = vcmask 31744
          %v619 = vsel %vm617, %v592, 0
          %v622 = vsel %vm617, %v593, 0
          %v625 = vsel %vm617, %v594, 0
          %v628 = vsel %vm617, %v595, 0
          %v631 = vsel %vm617, %v596, 0
          %v634 = vsel %vm617, %v597, 0
          %v637 = vsel %vm617, %v598, 0
          %v640 = vsel %vm617, %v599, 0
          %v643 = vsel %vm617, %v600, 0
          %v646 = vsel %vm617, %v601, 0
          %v649 = vsel %vm617, %v602, 0
          %v652 = vsel %vm617, %v603, 0
          %v655 = vsel %vm617, %v604, 0
          %v658 = vsel %vm617, %v605, 0
          %v661 = vsel %vm617, %v606, 0
          %v664 = vsel %vm617, %v607, 0
          %vm666 = vcmask 1041408
          %v668 = vsel %vm666, %v615, 0
          %v671 = vsel %vm666, %v616, 0
          %673 = vmatprep.subr.bf16.mxu0 %v671
          %674 = vmatpush1.bf16.msra.mxu0 %v668
          %675 = vmatprep.subr.bf16.mxu0 0
          %676 = vmatpush1.bf16.msra.mxu0 0
          %677 = vmatprep.subr.bf16.mxu0 0
          %678 = vmatpush1.bf16.msra.mxu0 0
          %679 = vmatprep.subr.bf16.mxu0 0
          %680 = vmatpush1.bf16.msra.mxu0 0
          %681 = vmatprep.subr.bf16.mxu0 0
          %682 = vmatpush1.bf16.msra.mxu0 0
          %683 = vmatprep.subr.bf16.mxu0 0
          %684 = vmatpush1.bf16.msra.mxu0 0
          %685 = vmatprep.subr.bf16.mxu0 0
          %686 = vmatpush1.bf16.msra.mxu0 0
          %687 = vmatprep.subr.bf16.mxu0 0
          %688 = vmatpush1.bf16.msra.mxu0 0
          %689 = vmatprep.subr.bf16.mxu0 0
          %690 = vmatpush1.bf16.msra.mxu0 0
          %691 = vmatprep.subr.bf16.mxu0 0
          %692 = vmatpush1.bf16.msra.mxu0 0
          %693 = vmatprep.subr.bf16.mxu0 0
          %694 = vmatpush1.bf16.msra.mxu0 0
          %695 = vmatprep.subr.bf16.mxu0 0
          %696 = vmatpush1.bf16.msra.mxu0 0
          %697 = vmatprep.subr.bf16.mxu0 0
          %698 = vmatpush1.bf16.msra.mxu0 0
          %699 = vmatprep.subr.bf16.mxu0 0
          %700 = vmatpush1.bf16.msra.mxu0 0
          %701 = vmatprep.subr.bf16.mxu0 0
          %702 = vmatpush1.bf16.msra.mxu0 0
          %703 = vmatprep.subr.bf16.mxu0 0
          %704 = vmatpush1.bf16.msra.mxu0 0
          %705 = vmatprep.mubr.bf16.mxu0 0
          %706 = vmatmul.mubr.bf16.gmra.mrb[0].mxu0 %v619
          %v707 = vpop.f32.mrb[0].mxu0
          %v708 = vadd.f32 %v371, %v707
          %v709 = vpop.f32.mrb[0].mxu0
          %v710 = vadd.f32 %v371, %v709
          %v711 = vpop.f32.mrb[0].mxu0
          %v712 = vadd.f32 %v376, %v711
          %v713 = vpop.f32.mrb[0].mxu0
          %v714 = vadd.f32 %v376, %v713
          %715 = vmatprep.mubr.bf16.mxu0 0
          %716 = vmatmul.mubr.bf16.gmra.mrb[0].mxu0 %v622
          %v717 = vpop.f32.mrb[0].mxu0
          %v718 = vadd.f32 %v381, %v717
          %v719 = vpop.f32.mrb[0].mxu0
          %v720 = vadd.f32 %v381, %v719
          %v721 = vpop.f32.mrb[0].mxu0
          %v722 = vadd.f32 %v386, %v721
          %v723 = vpop.f32.mrb[0].mxu0
          %v724 = vadd.f32 %v386, %v723
          %725 = vmatprep.mubr.bf16.mxu0 0
          %726 = vmatmul.mubr.bf16.gmra.mrb[0].mxu0 %v625
          %v727 = vpop.f32.mrb[0].mxu0
          %v728 = vadd.f32 %v391, %v727
          %v729 = vpop.f32.mrb[0].mxu0
          %v730 = vadd.f32 %v391, %v729
          %v731 = vpop.f32.mrb[0].mxu0
          %v732 = vadd.f32 %v396, %v731
          %v733 = vpop.f32.mrb[0].mxu0
          %v734 = vadd.f32 %v396, %v733
          %735 = vmatprep.mubr.bf16.mxu0 0
          %736 = vmatmul.mubr.bf16.gmra.mrb[0].mxu0 %v628
          %v737 = vpop.f32.mrb[0].mxu0
          %v738 = vadd.f32 %v401, %v737
          %v739 = vpop.f32.mrb[0].mxu0
          %v740 = vadd.f32 %v401, %v739
          %v741 = vpop.f32.mrb[0].mxu0
          %v742 = vadd.f32 %v406, %v741
          %v743 = vpop.f32.mrb[0].mxu0
          %v744 = vadd.f32 %v406, %v743
          %745 = vmatprep.mubr.bf16.mxu0 0
          %746 = vmatmul.mubr.bf16.gmra.mrb[0].mxu0 %v631
          %v747 = vpop.f32.mrb[0].mxu0
          %v748 = vadd.f32 %v411, %v747
          %v749 = vpop.f32.mrb[0].mxu0
          %v750 = vadd.f32 %v411, %v749
          %v751 = vpop.f32.mrb[0].mxu0
          %v752 = vadd.f32 %v416, %v751
          %v753 = vpop.f32.mrb[0].mxu0
          %v754 = vadd.f32 %v416, %v753
          %755 = vmatprep.mubr.bf16.mxu0 0
          %756 = vmatmul.mubr.bf16.gmra.mrb[0].mxu0 %v634
          %v757 = vpop.f32.mrb[0].mxu0
          %v758 = vadd.f32 %v421, %v757
          %v759 = vpop.f32.mrb[0].mxu0
          %v760 = vadd.f32 %v421, %v759
          %v761 = vpop.f32.mrb[0].mxu0
          %v762 = vadd.f32 %v426, %v761
          %v763 = vpop.f32.mrb[0].mxu0
          %v764 = vadd.f32 %v426, %v763
          %765 = vmatprep.mubr.bf16.mxu0 0
          %766 = vmatmul.mubr.bf16.gmra.mrb[0].mxu0 %v637
          %v767 = vpop.f32.mrb[0].mxu0
          %v768 = vadd.f32 %v431, %v767
          %v769 = vpop.f32.mrb[0].mxu0
          %v770 = vadd.f32 %v431, %v769
          %v771 = vpop.f32.mrb[0].mxu0
          %v772 = vadd.f32 %v436, %v771
          %v773 = vpop.f32.mrb[0].mxu0
          %v774 = vadd.f32 %v436, %v773
          %775 = vmatprep.mubr.bf16.mxu0 0
          %776 = vmatmul.mubr.bf16.gmra.mrb[0].mxu0 %v640
          %v777 = vpop.f32.mrb[0].mxu0
          %v778 = vadd.f32 %v441, %v777
          %v779 = vpop.f32.mrb[0].mxu0
          %v780 = vadd.f32 %v441, %v779
          %v781 = vpop.f32.mrb[0].mxu0
          %v782 = vadd.f32 %v446, %v781
          %v783 = vpop.f32.mrb[0].mxu0
          %v784 = vadd.f32 %v446, %v783
          %785 = vmatprep.mubr.bf16.mxu0 0
          %786 = vmatmul.mubr.bf16.gmra.mrb[0].mxu0 %v643
          %v787 = vpop.f32.mrb[0].mxu0
          %v788 = vadd.f32 %v451, %v787
          %v789 = vpop.f32.mrb[0].mxu0
          %v790 = vadd.f32 %v451, %v789
          %v791 = vpop.f32.mrb[0].mxu0
          %v792 = vadd.f32 %v456, %v791
          %v793 = vpop.f32.mrb[0].mxu0
          %v794 = vadd.f32 %v456, %v793
          %795 = vmatprep.mubr.bf16.mxu0 0
          %796 = vmatmul.mubr.bf16.gmra.mrb[0].mxu0 %v646
          %v797 = vpop.f32.mrb[0].mxu0
          %v798 = vadd.f32 %v461, %v797
          %v799 = vpop.f32.mrb[0].mxu0
          %v800 = vadd.f32 %v461, %v799
          %v801 = vpop.f32.mrb[0].mxu0
          %v802 = vadd.f32 %v466, %v801
          %v803 = vpop.f32.mrb[0].mxu0
          %v804 = vadd.f32 %v466, %v803
          %805 = vmatprep.mubr.bf16.mxu0 0
          %806 = vmatmul.mubr.bf16.gmra.mrb[0].mxu0 %v649
          %v807 = vpop.f32.mrb[0].mxu0
          %v808 = vadd.f32 %v471, %v807
          %v809 = vpop.f32.mrb[0].mxu0
          %v810 = vadd.f32 %v471, %v809
          %v811 = vpop.f32.mrb[0].mxu0
          %v812 = vadd.f32 %v476, %v811
          %v813 = vpop.f32.mrb[0].mxu0
          %v814 = vadd.f32 %v476, %v813
          %815 = vmatprep.mubr.bf16.mxu0 0
          %816 = vmatmul.mubr.bf16.gmra.mrb[0].mxu0 %v652
          %v817 = vpop.f32.mrb[0].mxu0
          %v818 = vadd.f32 %v481, %v817
          %v819 = vpop.f32.mrb[0].mxu0
          %v820 = vadd.f32 %v481, %v819
          %v821 = vpop.f32.mrb[0].mxu0
          %v822 = vadd.f32 %v486, %v821
          %v823 = vpop.f32.mrb[0].mxu0
          %v824 = vadd.f32 %v486, %v823
          %825 = vmatprep.mubr.bf16.mxu0 0
          %826 = vmatmul.mubr.bf16.gmra.mrb[0].mxu0 %v655
          %v827 = vpop.f32.mrb[0].mxu0
          %v828 = vadd.f32 %v491, %v827
          %v829 = vpop.f32.mrb[0].mxu0
          %v830 = vadd.f32 %v491, %v829
          %v831 = vpop.f32.mrb[0].mxu0
          %v832 = vadd.f32 %v496, %v831
          %v833 = vpop.f32.mrb[0].mxu0
          %v834 = vadd.f32 %v496, %v833
          %835 = vmatprep.mubr.bf16.mxu0 0
          %836 = vmatmul.mubr.bf16.gmra.mrb[0].mxu0 %v658
          %v837 = vpop.f32.mrb[0].mxu0
          %v838 = vadd.f32 %v501, %v837
          %v839 = vpop.f32.mrb[0].mxu0
          %v840 = vadd.f32 %v501, %v839
          %v841 = vpop.f32.mrb[0].mxu0
          %v842 = vadd.f32 %v506, %v841
          %v843 = vpop.f32.mrb[0].mxu0
          %v844 = vadd.f32 %v506, %v843
          %845 = vmatprep.mubr.bf16.mxu0 0
          %846 = vmatmul.mubr.bf16.gmra.mrb[0].mxu0 %v661
          %v847 = vpop.f32.mrb[0].mxu0
          %v848 = vadd.f32 %v511, %v847
          %v849 = vpop.f32.mrb[0].mxu0
          %v850 = vadd.f32 %v511, %v849
          %v851 = vpop.f32.mrb[0].mxu0
          %v852 = vadd.f32 %v516, %v851
          %v853 = vpop.f32.mrb[0].mxu0
          %v854 = vadd.f32 %v516, %v853
          %855 = vmatprep.mubr.bf16.mxu0 0
          %856 = vmatmul.mubr.bf16.gmra.mrb[0].mxu0 %v664
          %v857 = vpop.f32.mrb[0].mxu0
          %v858 = vadd.f32 %v521, %v857
          %v859 = vpop.f32.mrb[0].mxu0
          %v860 = vadd.f32 %v521, %v859
          %v861 = vpop.f32.mrb[0].mxu0
          %v862 = vadd.f32 %v526, %v861
          %v863 = vpop.f32.mrb[0].mxu0
          %v864 = vadd.f32 %v526, %v863
          %865 = vdwg.mxu0
          %v866 = vmul.f32 %v708, 0.35355338
          %v867 = vmul.f32 %v710, 0.35355338
          %v868 = vmul.f32 %v712, 0.35355338
          %v869 = vmul.f32 %v714, 0.35355338
          %v870 = vmul.f32 %v718, 0.35355338
          %v871 = vmul.f32 %v720, 0.35355338
          %v872 = vmul.f32 %v722, 0.35355338
          %v873 = vmul.f32 %v724, 0.35355338
          %v874 = vmul.f32 %v728, 0.35355338
          %v875 = vmul.f32 %v730, 0.35355338
          %v876 = vmul.f32 %v732, 0.35355338
          %v877 = vmul.f32 %v734, 0.35355338
          %v878 = vmul.f32 %v738, 0.35355338
          %v879 = vmul.f32 %v740, 0.35355338
          %v880 = vmul.f32 %v742, 0.35355338
          %v881 = vmul.f32 %v744, 0.35355338
          %v882 = vmul.f32 %v748, 0.35355338
          %v883 = vmul.f32 %v750, 0.35355338
          %v884 = vmul.f32 %v752, 0.35355338
          %v885 = vmul.f32 %v754, 0.35355338
          %v886 = vmul.f32 %v758, 0.35355338
          %v887 = vmul.f32 %v760, 0.35355338
          %v888 = vmul.f32 %v762, 0.35355338
          %v889 = vmul.f32 %v764, 0.35355338
          %v890 = vmul.f32 %v768, 0.35355338
          %v891 = vmul.f32 %v770, 0.35355338
          %v892 = vmul.f32 %v772, 0.35355338
          %v893 = vmul.f32 %v774, 0.35355338
          %v894 = vmul.f32 %v778, 0.35355338
          %v895 = vmul.f32 %v780, 0.35355338
          %v896 = vmul.f32 %v782, 0.35355338
          %v897 = vmul.f32 %v784, 0.35355338
          %v898 = vpack.c.bf16 %v868, %v866
          %v899 = vpack.c.bf16 %v869, %v867
          %v900 = vpack.c.bf16 %v872, %v870
          %v901 = vpack.c.bf16 %v873, %v871
          %v902 = vpack.c.bf16 %v876, %v874
          %v903 = vpack.c.bf16 %v877, %v875
          %v904 = vpack.c.bf16 %v880, %v878
          %v905 = vpack.c.bf16 %v881, %v879
          %v906 = vpack.c.bf16 %v884, %v882
          %v907 = vpack.c.bf16 %v885, %v883
          %v908 = vpack.c.bf16 %v888, %v886
          %v909 = vpack.c.bf16 %v889, %v887
          %v910 = vpack.c.bf16 %v892, %v890
          %v911 = vpack.c.bf16 %v893, %v891
          %v912 = vpack.c.bf16 %v896, %v894
          %v913 = vpack.c.bf16 %v897, %v895
          %914 = vst [vmem:[#allocation2] sm:$0xff] %v898
          %915 = vst [vmem:[#allocation2 + $0x8] sm:$0xff] %v899
          %916 = vst [vmem:[#allocation2 + $0x10] sm:$0xff] %v900
          %917 = vst [vmem:[#allocation2 + $0x18] sm:$0xff] %v901
          %918 = vst [vmem:[#allocation2 + $0x20] sm:$0xff] %v902
          %919 = vst [vmem:[#allocation2 + $0x28] sm:$0xff] %v903
          %920 = vst [vmem:[#allocation2 + $0x30] sm:$0xff] %v904
          %921 = vst [vmem:[#allocation2 + $0x38] sm:$0xff] %v905
          %922 = vst [vmem:[#allocation2 + $0x40] sm:$0xff] %v906
          %923 = vst [vmem:[#allocation2 + $0x48] sm:$0xff] %v907
          %924 = vst [vmem:[#allocation2 + $0x50] sm:$0xff] %v908
          %925 = vst [vmem:[#allocation2 + $0x58] sm:$0xff] %v909
          %926 = vst [vmem:[#allocation2 + $0x60] sm:$0xff] %v910
          %927 = vst [vmem:[#allocation2 + $0x68] sm:$0xff] %v911
          %928 = vst [vmem:[#allocation2 + $0x70] sm:$0xff] %v912
          %929 = vst [vmem:[#allocation2 + $0x78] sm:$0xff] %v913
          %v930 = vpack.c.bf16 %v792, %v788
          %v931 = vpack.c.bf16 %v794, %v790
          %v932 = vpack.c.bf16 %v802, %v798
          %v933 = vpack.c.bf16 %v804, %v800
          %v934 = vpack.c.bf16 %v812, %v808
          %v935 = vpack.c.bf16 %v814, %v810
          %v936 = vpack.c.bf16 %v822, %v818
          %v937 = vpack.c.bf16 %v824, %v820
          %v938 = vpack.c.bf16 %v832, %v828
          %v939 = vpack.c.bf16 %v834, %v830
          %v940 = vpack.c.bf16 %v842, %v838
          %v941 = vpack.c.bf16 %v844, %v840
          %v942 = vpack.c.bf16 %v852, %v848
          %v943 = vpack.c.bf16 %v854, %v850
          %v944 = vpack.c.bf16 %v862, %v858
          %v945 = vpack.c.bf16 %v864, %v860
          %946 = vst [vmem:[#allocation3] sm:$0xff] %v930
          %947 = vst [vmem:[#allocation3 + $0x8] sm:$0xff] %v931
          %948 = vst [vmem:[#allocation3 + $0x10] sm:$0xff] %v932
          %949 = vst [vmem:[#allocation3 + $0x18] sm:$0xff] %v933
          %950 = vst [vmem:[#allocation3 + $0x20] sm:$0xff] %v934
          %951 = vst [vmem:[#allocation3 + $0x28] sm:$0xff] %v935
          %952 = vst [vmem:[#allocation3 + $0x30] sm:$0xff] %v936
          %953 = vst [vmem:[#allocation3 + $0x38] sm:$0xff] %v937
          %954 = vst [vmem:[#allocation3 + $0x40] sm:$0xff] %v938
          %955 = vst [vmem:[#allocation3 + $0x48] sm:$0xff] %v939
          %956 = vst [vmem:[#allocation3 + $0x50] sm:$0xff] %v940
          %957 = vst [vmem:[#allocation3 + $0x58] sm:$0xff] %v941
          %958 = vst [vmem:[#allocation3 + $0x60] sm:$0xff] %v942
          %959 = vst [vmem:[#allocation3 + $0x68] sm:$0xff] %v943
          %960 = vst [vmem:[#allocation3 + $0x70] sm:$0xff] %v944
          %961 = vst [vmem:[#allocation3 + $0x78] sm:$0xff] %v945
          %962 = vst [vmem:[%s282] sm:$0xff] 0.0
          %963 = vst [vmem:[%s282 + $0x8] sm:$0xff] 0.0
          %964 = vst [vmem:[%s282 + $0x10] sm:$0xff] 0.0
          %965 = vst [vmem:[%s282 + $0x18] sm:$0xff] 0.0
          %966 = vst [vmem:[%s282 + $0x20] sm:$0xff] 0.0
          %967 = vst [vmem:[%s282 + $0x28] sm:$0xff] 0.0
          %968 = vst [vmem:[%s282 + $0x30] sm:$0xff] 0.0
          %969 = vst [vmem:[%s282 + $0x38] sm:$0xff] 0.0
          %970 = vst [vmem:[%s282 + $0x40] sm:$0xff] 0.0
          %971 = vst [vmem:[%s282 + $0x48] sm:$0xff] 0.0
          %972 = vst [vmem:[%s282 + $0x50] sm:$0xff] 0.0
          %973 = vst [vmem:[%s282 + $0x58] sm:$0xff] 0.0
          %974 = vst [vmem:[%s282 + $0x60] sm:$0xff] 0.0
          %975 = vst [vmem:[%s282 + $0x68] sm:$0xff] 0.0
          %976 = vst [vmem:[%s282 + $0x70] sm:$0xff] 0.0
          %977 = vst [vmem:[%s282 + $0x78] sm:$0xff] 0.0
          %978 = vst [vmem:[%s282 + $0x80] sm:$0xff] 0.0
          %979 = vst [vmem:[%s282 + $0x88] sm:$0xff] 0.0
          %980 = vst [vmem:[%s282 + $0x90] sm:$0xff] 0.0
          %981 = vst [vmem:[%s282 + $0x98] sm:$0xff] 0.0
          %982 = vst [vmem:[%s282 + $0xa0] sm:$0xff] 0.0
          %983 = vst [vmem:[%s282 + $0xa8] sm:$0xff] 0.0
          %984 = vst [vmem:[%s282 + $0xb0] sm:$0xff] 0.0
          %985 = vst [vmem:[%s282 + $0xb8] sm:$0xff] 0.0
          %986 = vst [vmem:[%s282 + $0xc0] sm:$0xff] 0.0
          %987 = vst [vmem:[%s282 + $0xc8] sm:$0xff] 0.0
          %988 = vst [vmem:[%s282 + $0xd0] sm:$0xff] 0.0
          %989 = vst [vmem:[%s282 + $0xd8] sm:$0xff] 0.0
          %990 = vst [vmem:[%s282 + $0xe0] sm:$0xff] 0.0
          %991 = vst [vmem:[%s282 + $0xe8] sm:$0xff] 0.0
          %992 = vst [vmem:[%s282 + $0xf0] sm:$0xff] 0.0
          %993 = vst [vmem:[%s282 + $0xf8] sm:$0xff] 0.0
        $region48: #{tpu_custom_call.1} parent=43 // pred_fallthru
          _
        %v994 = vld [vmem:[%s296] sm:$0xf]
        %v995 = vld [vmem:[%s296 + $0x4] sm:$0xf]
        %v996 = vld [vmem:[%s296 + $0x8] sm:$0xf]
        %v997 = vld [vmem:[%s296 + $0xc] sm:$0xf]
        %v998 = vld [vmem:[%s296 + $0x10] sm:$0xf]
        %v999 = vld [vmem:[%s296 + $0x14] sm:$0xf]
        %v1000 = vld [vmem:[%s296 + $0x18] sm:$0xf]
        %v1001 = vld [vmem:[%s296 + $0x1c] sm:$0xf]
        %v1002 = vld [vmem:[%s296 + $0x20] sm:$0xf]
        %v1003 = vld [vmem:[%s296 + $0x24] sm:$0xf]
        %v1004 = vld [vmem:[%s296 + $0x28] sm:$0xf]
        %v1005 = vld [vmem:[%s296 + $0x2c] sm:$0xf]
        %v1006 = vld [vmem:[%s296 + $0x30] sm:$0xf]
        %v1007 = vld [vmem:[%s296 + $0x34] sm:$0xf]
        %v1008 = vld [vmem:[%s296 + $0x38] sm:$0xf]
        %v1009 = vld [vmem:[%s296 + $0x3c] sm:$0xf]
        %v1010 = vld [vmem:[%s4] sm:$0x3]
        %v1011 = vld [vmem:[%s5] sm:$0x1]
        %v1013 = vlaneseq
        %v1014 = vshrl.u32 %v1013, 7
        %v1015 = vsub.s32 0, %v1014
        %v1016 = vrot.slane %v1011, %v1015
        %v1034 = vunpack.c.l.b16 %v994
        %v1035 = vunpack.c.l.b16 %v995
        %v1036 = vunpack.c.l.b16 %v996
        %v1037 = vunpack.c.l.b16 %v997
        %v1038 = vunpack.c.l.b16 %v998
        %v1039 = vunpack.c.l.b16 %v999
        %v1040 = vunpack.c.l.b16 %v1000
        %v1041 = vunpack.c.l.b16 %v1001
        %v1042 = vunpack.c.l.b16 %v1002
        %v1043 = vunpack.c.l.b16 %v1003
        %v1044 = vunpack.c.l.b16 %v1004
        %v1045 = vunpack.c.l.b16 %v1005
        %v1046 = vunpack.c.l.b16 %v1006
        %v1047 = vunpack.c.l.b16 %v1007
        %v1048 = vunpack.c.l.b16 %v1008
        %v1049 = vunpack.c.l.b16 %v1009
        %v1050 = vpack.c.b16 %v1035, %v1034
        %v1051 = vpack.c.b16 %v1037, %v1036
        %v1052 = vpack.c.b16 %v1039, %v1038
        %v1053 = vpack.c.b16 %v1041, %v1040
        %v1054 = vpack.c.b16 %v1043, %v1042
        %v1055 = vpack.c.b16 %v1045, %v1044
        %v1056 = vpack.c.b16 %v1047, %v1046
        %v1057 = vpack.c.b16 %v1049, %v1048
        %vm1058 = vcmask 31744
        %v1060 = vsel %vm1058, %v1050, 0
        %v1063 = vsel %vm1058, %v1051, 0
        %v1066 = vsel %vm1058, %v1052, 0
        %v1069 = vsel %vm1058, %v1053, 0
        %v1072 = vsel %vm1058, %v1054, 0
        %v1075 = vsel %vm1058, %v1055, 0
        %v1078 = vsel %vm1058, %v1056, 0
        %v1081 = vsel %vm1058, %v1057, 0
        %vm1083 = vcmask 1041408
        %v1085 = vsel %vm1083, %v1010, 0
        %1087 = vmatprep.subr.bf16.mxu0 0
        %1088 = vmatpush1.bf16.msra.mxu0 %v1085
        %1089 = vmatprep.subr.bf16.mxu0 0
        %1090 = vmatpush1.bf16.msra.mxu0 0
        %1091 = vmatprep.subr.bf16.mxu0 0
        %1092 = vmatpush1.bf16.msra.mxu0 0
        %1093 = vmatprep.subr.bf16.mxu0 0
        %1094 = vmatpush1.bf16.msra.mxu0 0
        %1095 = vmatprep.subr.bf16.mxu0 0
        %1096 = vmatpush1.bf16.msra.mxu0 0
        %1097 = vmatprep.subr.bf16.mxu0 0
        %1098 = vmatpush1.bf16.msra.mxu0 0
        %1099 = vmatprep.subr.bf16.mxu0 0
        %1100 = vmatpush1.bf16.msra.mxu0 0
        %1101 = vmatprep.subr.bf16.mxu0 0
        %1102 = vmatpush1.bf16.msra.mxu0 0
        %1103 = vmatprep.subr.bf16.mxu0 0
        %1104 = vmatpush1.bf16.msra.mxu0 0
        %1105 = vmatprep.subr.bf16.mxu0 0
        %1106 = vmatpush1.bf16.msra.mxu0 0
        %1107 = vmatprep.subr.bf16.mxu0 0
        %1108 = vmatpush1.bf16.msra.mxu0 0
        %1109 = vmatprep.subr.bf16.mxu0 0
        %1110 = vmatpush1.bf16.msra.mxu0 0
        %1111 = vmatprep.subr.bf16.mxu0 0
        %1112 = vmatpush1.bf16.msra.mxu0 0
        %1113 = vmatprep.subr.bf16.mxu0 0
        %1114 = vmatpush1.bf16.msra.mxu0 0
        %1115 = vmatprep.subr.bf16.mxu0 0
        %1116 = vmatpush1.bf16.msra.mxu0 0
        %1117 = vmatprep.subr.bf16.mxu0 0
        %1118 = vmatpush1.bf16.msra.mxu0 0
        %1119 = vmatprep.mubr.bf16.mxu0 0
        %1120 = vmatmul.mubr.bf16.gmra.mrb[0].mxu0 %v1060
        %v1121 = vpop.f32.mrb[0].mxu0
        %v1122 = vadd.f32 %v1016, %v1121
        %v1123 = vpop.f32.mrb[0].mxu0
        %v1124 = vpop.f32.mrb[0].mxu0
        %v1125 = vadd.f32 %v1016, %v1124
        %v1126 = vpop.f32.mrb[0].mxu0
        %1127 = vmatprep.mubr.bf16.mxu0 0
        %1128 = vmatmul.mubr.bf16.gmra.mrb[0].mxu0 %v1063
        %v1129 = vpop.f32.mrb[0].mxu0
        %v1130 = vadd.f32 %v1016, %v1129
        %v1131 = vpop.f32.mrb[0].mxu0
        %v1132 = vpop.f32.mrb[0].mxu0
        %v1133 = vadd.f32 %v1016, %v1132
        %v1134 = vpop.f32.mrb[0].mxu0
        %1135 = vmatprep.mubr.bf16.mxu0 0
        %1136 = vmatmul.mubr.bf16.gmra.mrb[0].mxu0 %v1066
        %v1137 = vpop.f32.mrb[0].mxu0
        %v1138 = vadd.f32 %v1016, %v1137
        %v1139 = vpop.f32.mrb[0].mxu0
        %v1140 = vpop.f32.mrb[0].mxu0
        %v1141 = vadd.f32 %v1016, %v1140
        %v1142 = vpop.f32.mrb[0].mxu0
        %1143 = vmatprep.mubr.bf16.mxu0 0
        %1144 = vmatmul.mubr.bf16.gmra.mrb[0].mxu0 %v1069
        %v1145 = vpop.f32.mrb[0].mxu0
        %v1146 = vadd.f32 %v1016, %v1145
        %v1147 = vpop.f32.mrb[0].mxu0
        %v1148 = vpop.f32.mrb[0].mxu0
        %v1149 = vadd.f32 %v1016, %v1148
        %v1150 = vpop.f32.mrb[0].mxu0
        %1151 = vmatprep.mubr.bf16.mxu0 0
        %1152 = vmatmul.mubr.bf16.gmra.mrb[0].mxu0 %v1072
        %v1153 = vpop.f32.mrb[0].mxu0
        %v1154 = vadd.f32 %v1016, %v1153
        %v1155 = vpop.f32.mrb[0].mxu0
        %v1156 = vpop.f32.mrb[0].mxu0
        %v1157 = vadd.f32 %v1016, %v1156
        %v1158 = vpop.f32.mrb[0].mxu0
        %1159 = vmatprep.mubr.bf16.mxu0 0
        %1160 = vmatmul.mubr.bf16.gmra.mrb[0].mxu0 %v1075
        %v1161 = vpop.f32.mrb[0].mxu0
        %v1162 = vadd.f32 %v1016, %v1161
        %v1163 = vpop.f32.mrb[0].mxu0
        %v1164 = vpop.f32.mrb[0].mxu0
        %v1165 = vadd.f32 %v1016, %v1164
        %v1166 = vpop.f32.mrb[0].mxu0
        %1167 = vmatprep.mubr.bf16.mxu0 0
        %1168 = vmatmul.mubr.bf16.gmra.mrb[0].mxu0 %v1078
        %v1169 = vpop.f32.mrb[0].mxu0
        %v1170 = vadd.f32 %v1016, %v1169
        %v1171 = vpop.f32.mrb[0].mxu0
        %v1172 = vpop.f32.mrb[0].mxu0
        %v1173 = vadd.f32 %v1016, %v1172
        %v1174 = vpop.f32.mrb[0].mxu0
        %1175 = vmatprep.mubr.bf16.mxu0 0
        %1176 = vmatmul.mubr.bf16.gmra.mrb[0].mxu0 %v1081
        %v1177 = vpop.f32.mrb[0].mxu0
        %v1178 = vadd.f32 %v1016, %v1177
        %v1179 = vpop.f32.mrb[0].mxu0
        %v1180 = vpop.f32.mrb[0].mxu0
        %v1181 = vadd.f32 %v1016, %v1180
        %v1182 = vpop.f32.mrb[0].mxu0
        %1183 = vdwg.mxu0
        %v1184 = vpack.c.bf16 %v1125, %v1122
        %v1185 = vpack.c.bf16 %v1133, %v1130
        %v1186 = vpack.c.bf16 %v1141, %v1138
        %v1187 = vpack.c.bf16 %v1149, %v1146
        %v1188 = vpack.c.bf16 %v1157, %v1154
        %v1189 = vpack.c.bf16 %v1165, %v1162
        %v1190 = vpack.c.bf16 %v1173, %v1170
        %v1191 = vpack.c.bf16 %v1181, %v1178
        %v1192 = vld [vmem:[#allocation2] sm:$0xff]
        %v1193 = vld [vmem:[#allocation2 + $0x8] sm:$0xff]
        %v1194 = vld [vmem:[#allocation2 + $0x10] sm:$0xff]
        %v1195 = vld [vmem:[#allocation2 + $0x18] sm:$0xff]
        %v1196 = vld [vmem:[#allocation2 + $0x20] sm:$0xff]
        %v1197 = vld [vmem:[#allocation2 + $0x28] sm:$0xff]
        %v1198 = vld [vmem:[#allocation2 + $0x30] sm:$0xff]
        %v1199 = vld [vmem:[#allocation2 + $0x38] sm:$0xff]
        %v1200 = vld [vmem:[#allocation2 + $0x40] sm:$0xff]
        %v1201 = vld [vmem:[#allocation2 + $0x48] sm:$0xff]
        %v1202 = vld [vmem:[#allocation2 + $0x50] sm:$0xff]
        %v1203 = vld [vmem:[#allocation2 + $0x58] sm:$0xff]
        %v1204 = vld [vmem:[#allocation2 + $0x60] sm:$0xff]
        %v1205 = vld [vmem:[#allocation2 + $0x68] sm:$0xff]
        %v1206 = vld [vmem:[#allocation2 + $0x70] sm:$0xff]
        %v1207 = vld [vmem:[#allocation2 + $0x78] sm:$0xff]
        %1208 = vmatprep.subr.bf16.mxu0 %v1193
        %1209 = vmatpush1.bf16.msra.mxu0 %v1192
        %1210 = vmatprep.subr.bf16.mxu0 %v1195
        %1211 = vmatpush1.bf16.msra.mxu0 %v1194
        %1212 = vmatprep.subr.bf16.mxu0 %v1197
        %1213 = vmatpush1.bf16.msra.mxu0 %v1196
        %1214 = vmatprep.subr.bf16.mxu0 %v1199
        %1215 = vmatpush1.bf16.msra.mxu0 %v1198
        %1216 = vmatprep.subr.bf16.mxu0 %v1201
        %1217 = vmatpush1.bf16.msra.mxu0 %v1200
        %1218 = vmatprep.subr.bf16.mxu0 %v1203
        %1219 = vmatpush1.bf16.msra.mxu0 %v1202
        %1220 = vmatprep.subr.bf16.mxu0 %v1205
        %1221 = vmatpush1.bf16.msra.mxu0 %v1204
        %1222 = vmatprep.subr.bf16.mxu0 %v1207
        %1223 = vmatpush1.bf16.msra.mxu0 %v1206
        %1224 = vmatprep.subr.bf16.mxu0 0
        %1225 = vmatpush1.bf16.msra.mxu0 0
        %1226 = vmatprep.subr.bf16.mxu0 0
        %1227 = vmatpush1.bf16.msra.mxu0 0
        %1228 = vmatprep.subr.bf16.mxu0 0
        %1229 = vmatpush1.bf16.msra.mxu0 0
        %1230 = vmatprep.subr.bf16.mxu0 0
        %1231 = vmatpush1.bf16.msra.mxu0 0
        %1232 = vmatprep.subr.bf16.mxu0 0
        %1233 = vmatpush1.bf16.msra.mxu0 0
        %1234 = vmatprep.subr.bf16.mxu0 0
        %1235 = vmatpush1.bf16.msra.mxu0 0
        %1236 = vmatprep.subr.bf16.mxu0 0
        %1237 = vmatpush1.bf16.msra.mxu0 0
        %1238 = vmatprep.subr.bf16.mxu0 0
        %1239 = vmatpush1.bf16.msra.mxu0 0
        %1240 = vmatprep.mubr.bf16.mxu0 0
        %1241 = vmatmul.mubr.bf16.gmra.mrb[0].mxu0 %v1184
        %v1242 = vpop.f32.mrb[0].mxu0
        %v1243 = vadd.f32 0.0, %v1242
        %v1244 = vpop.f32.mrb[0].mxu0
        %v1245 = vadd.f32 0.0, %v1244
        %v1246 = vpop.f32.mrb[0].mxu0
        %v1247 = vadd.f32 0.0, %v1246
        %v1248 = vpop.f32.mrb[0].mxu0
        %v1249 = vadd.f32 0.0, %v1248
        %1250 = vmatprep.mubr.bf16.mxu0 0
        %1251 = vmatmul.mubr.bf16.gmra.mrb[0].mxu0 %v1185
        %v1252 = vpop.f32.mrb[0].mxu0
        %v1253 = vadd.f32 0.0, %v1252
        %v1254 = vpop.f32.mrb[0].mxu0
        %v1255 = vadd.f32 0.0, %v1254
        %v1256 = vpop.f32.mrb[0].mxu0
        %v1257 = vadd.f32 0.0, %v1256
        %v1258 = vpop.f32.mrb[0].mxu0
        %v1259 = vadd.f32 0.0, %v1258
        %1260 = vmatprep.mubr.bf16.mxu0 0
        %1261 = vmatmul.mubr.bf16.gmra.mrb[0].mxu0 %v1186
        %v1262 = vpop.f32.mrb[0].mxu0
        %v1263 = vadd.f32 0.0, %v1262
        %v1264 = vpop.f32.mrb[0].mxu0
        %v1265 = vadd.f32 0.0, %v1264
        %v1266 = vpop.f32.mrb[0].mxu0
        %v1267 = vadd.f32 0.0, %v1266
        %v1268 = vpop.f32.mrb[0].mxu0
        %v1269 = vadd.f32 0.0, %v1268
        %1270 = vmatprep.mubr.bf16.mxu0 0
        %1271 = vmatmul.mubr.bf16.gmra.mrb[0].mxu0 %v1187
        %v1272 = vpop.f32.mrb[0].mxu0
        %v1273 = vadd.f32 0.0, %v1272
        %v1274 = vpop.f32.mrb[0].mxu0
        %v1275 = vadd.f32 0.0, %v1274
        %v1276 = vpop.f32.mrb[0].mxu0
        %v1277 = vadd.f32 0.0, %v1276
        %v1278 = vpop.f32.mrb[0].mxu0
        %v1279 = vadd.f32 0.0, %v1278
        %1280 = vmatprep.mubr.bf16.mxu0 0
        %1281 = vmatmul.mubr.bf16.gmra.mrb[0].mxu0 %v1188
        %v1282 = vpop.f32.mrb[0].mxu0
        %v1283 = vadd.f32 0.0, %v1282
        %v1284 = vpop.f32.mrb[0].mxu0
        %v1285 = vadd.f32 0.0, %v1284
        %v1286 = vpop.f32.mrb[0].mxu0
        %v1287 = vadd.f32 0.0, %v1286
        %v1288 = vpop.f32.mrb[0].mxu0
        %v1289 = vadd.f32 0.0, %v1288
        %1290 = vmatprep.mubr.bf16.mxu0 0
        %1291 = vmatmul.mubr.bf16.gmra.mrb[0].mxu0 %v1189
        %v1292 = vpop.f32.mrb[0].mxu0
        %v1293 = vadd.f32 0.0, %v1292
        %v1294 = vpop.f32.mrb[0].mxu0
        %v1295 = vadd.f32 0.0, %v1294
        %v1296 = vpop.f32.mrb[0].mxu0
        %v1297 = vadd.f32 0.0, %v1296
        %v1298 = vpop.f32.mrb[0].mxu0
        %v1299 = vadd.f32 0.0, %v1298
        %1300 = vmatprep.mubr.bf16.mxu0 0
        %1301 = vmatmul.mubr.bf16.gmra.mrb[0].mxu0 %v1190
        %v1302 = vpop.f32.mrb[0].mxu0
        %v1303 = vadd.f32 0.0, %v1302
        %v1304 = vpop.f32.mrb[0].mxu0
        %v1305 = vadd.f32 0.0, %v1304
        %v1306 = vpop.f32.mrb[0].mxu0
        %v1307 = vadd.f32 0.0, %v1306
        %v1308 = vpop.f32.mrb[0].mxu0
        %v1309 = vadd.f32 0.0, %v1308
        %1310 = vmatprep.mubr.bf16.mxu0 0
        %1311 = vmatmul.mubr.bf16.gmra.mrb[0].mxu0 %v1191
        %v1312 = vpop.f32.mrb[0].mxu0
        %v1313 = vadd.f32 0.0, %v1312
        %v1314 = vpop.f32.mrb[0].mxu0
        %v1315 = vadd.f32 0.0, %v1314
        %v1316 = vpop.f32.mrb[0].mxu0
        %v1317 = vadd.f32 0.0, %v1316
        %v1318 = vpop.f32.mrb[0].mxu0
        %v1319 = vadd.f32 0.0, %v1318
        %1320 = vdwg.mxu0
        %v1321 = vmax.f32 %v1243, %v1245
        %1322 = vmax.xlane.f32.xlu0 %v1321
        %v1323 = vpop.xlane.xlu0 %1322
        %v1324 = vmax.f32 %v1247, %v1249
        %1325 = vmax.xlane.f32.xlu0 %v1324
        %v1326 = vpop.xlane.xlu0 %1325
        %v1327 = vmax.f32 %v1253, %v1255
        %1328 = vmax.xlane.f32.xlu0 %v1327
        %v1329 = vpop.xlane.xlu0 %1328
        %v1330 = vmax.f32 %v1257, %v1259
        %1331 = vmax.xlane.f32.xlu0 %v1330
        %v1332 = vpop.xlane.xlu0 %1331
        %v1333 = vmax.f32 %v1263, %v1265
        %1334 = vmax.xlane.f32.xlu0 %v1333
        %v1335 = vpop.xlane.xlu0 %1334
        %v1336 = vmax.f32 %v1267, %v1269
        %1337 = vmax.xlane.f32.xlu0 %v1336
        %v1338 = vpop.xlane.xlu0 %1337
        %v1339 = vmax.f32 %v1273, %v1275
        %1340 = vmax.xlane.f32.xlu0 %v1339
        %v1341 = vpop.xlane.xlu0 %1340
        %v1342 = vmax.f32 %v1277, %v1279
        %1343 = vmax.xlane.f32.xlu0 %v1342
        %v1344 = vpop.xlane.xlu0 %1343
        %v1345 = vmax.f32 %v1283, %v1285
        %1346 = vmax.xlane.f32.xlu0 %v1345
        %v1347 = vpop.xlane.xlu0 %1346
        %v1348 = vmax.f32 %v1287, %v1289
        %1349 = vmax.xlane.f32.xlu0 %v1348
        %v1350 = vpop.xlane.xlu0 %1349
        %v1351 = vmax.f32 %v1293, %v1295
        %1352 = vmax.xlane.f32.xlu0 %v1351
        %v1353 = vpop.xlane.xlu0 %1352
        %v1354 = vmax.f32 %v1297, %v1299
        %1355 = vmax.xlane.f32.xlu0 %v1354
        %v1356 = vpop.xlane.xlu0 %1355
        %v1357 = vmax.f32 %v1303, %v1305
        %1358 = vmax.xlane.f32.xlu0 %v1357
        %v1359 = vpop.xlane.xlu0 %1358
        %v1360 = vmax.f32 %v1307, %v1309
        %1361 = vmax.xlane.f32.xlu0 %v1360
        %v1362 = vpop.xlane.xlu0 %1361
        %v1363 = vmax.f32 %v1313, %v1315
        %1364 = vmax.xlane.f32.xlu0 %v1363
        %v1365 = vpop.xlane.xlu0 %1364
        %v1366 = vmax.f32 %v1317, %v1319
        %1367 = vmax.xlane.f32.xlu0 %v1366
        %v1368 = vpop.xlane.xlu0 %1367
        %v1369 = vsub.f32 %v1243, %v1323
        %v1370 = vsub.f32 %v1245, %v1323
        %v1371 = vsub.f32 %v1247, %v1326
        %v1372 = vsub.f32 %v1249, %v1326
        %v1373 = vsub.f32 %v1253, %v1329
        %v1374 = vsub.f32 %v1255, %v1329
        %v1375 = vsub.f32 %v1257, %v1332
        %v1376 = vsub.f32 %v1259, %v1332
        %v1377 = vsub.f32 %v1263, %v1335
        %v1378 = vsub.f32 %v1265, %v1335
        %v1379 = vsub.f32 %v1267, %v1338
        %v1380 = vsub.f32 %v1269, %v1338
        %v1381 = vsub.f32 %v1273, %v1341
        %v1382 = vsub.f32 %v1275, %v1341
        %v1383 = vsub.f32 %v1277, %v1344
        %v1384 = vsub.f32 %v1279, %v1344
        %v1385 = vsub.f32 %v1283, %v1347
        %v1386 = vsub.f32 %v1285, %v1347
        %v1387 = vsub.f32 %v1287, %v1350
        %v1388 = vsub.f32 %v1289, %v1350
        %v1389 = vsub.f32 %v1293, %v1353
        %v1390 = vsub.f32 %v1295, %v1353
        %v1391 = vsub.f32 %v1297, %v1356
        %v1392 = vsub.f32 %v1299, %v1356
        %v1393 = vsub.f32 %v1303, %v1359
        %v1394 = vsub.f32 %v1305, %v1359
        %v1395 = vsub.f32 %v1307, %v1362
        %v1396 = vsub.f32 %v1309, %v1362
        %v1397 = vsub.f32 %v1313, %v1365
        %v1398 = vsub.f32 %v1315, %v1365
        %v1399 = vsub.f32 %v1317, %v1368
        %v1400 = vsub.f32 %v1319, %v1368
        %v1401 = vmul.f32 %v1369, 1.442695
        %v1402 = vpow.pop %v1401
        %v1403 = vmul.f32 %v1370, 1.442695
        %v1404 = vpow.pop %v1403
        %v1405 = vmul.f32 %v1371, 1.442695
        %v1406 = vpow.pop %v1405
        %v1407 = vmul.f32 %v1372, 1.442695
        %v1408 = vpow.pop %v1407
        %v1409 = vmul.f32 %v1373, 1.442695
        %v1410 = vpow.pop %v1409
        %v1411 = vmul.f32 %v1374, 1.442695
        %v1412 = vpow.pop %v1411
        %v1413 = vmul.f32 %v1375, 1.442695
        %v1414 = vpow.pop %v1413
        %v1415 = vmul.f32 %v1376, 1.442695
        %v1416 = vpow.pop %v1415
        %v1417 = vmul.f32 %v1377, 1.442695
        %v1418 = vpow.pop %v1417
        %v1419 = vmul.f32 %v1378, 1.442695
        %v1420 = vpow.pop %v1419
        %v1421 = vmul.f32 %v1379, 1.442695
        %v1422 = vpow.pop %v1421
        %v1423 = vmul.f32 %v1380, 1.442695
        %v1424 = vpow.pop %v1423
        %v1425 = vmul.f32 %v1381, 1.442695
        %v1426 = vpow.pop %v1425
        %v1427 = vmul.f32 %v1382, 1.442695
        %v1428 = vpow.pop %v1427
        %v1429 = vmul.f32 %v1383, 1.442695
        %v1430 = vpow.pop %v1429
        %v1431 = vmul.f32 %v1384, 1.442695
        %v1432 = vpow.pop %v1431
        %v1433 = vmul.f32 %v1385, 1.442695
        %v1434 = vpow.pop %v1433
        %v1435 = vmul.f32 %v1386, 1.442695
        %v1436 = vpow.pop %v1435
        %v1437 = vmul.f32 %v1387, 1.442695
        %v1438 = vpow.pop %v1437
        %v1439 = vmul.f32 %v1388, 1.442695
        %v1440 = vpow.pop %v1439
        %v1441 = vmul.f32 %v1389, 1.442695
        %v1442 = vpow.pop %v1441
        %v1443 = vmul.f32 %v1390, 1.442695
        %v1444 = vpow.pop %v1443
        %v1445 = vmul.f32 %v1391, 1.442695
        %v1446 = vpow.pop %v1445
        %v1447 = vmul.f32 %v1392, 1.442695
        %v1448 = vpow.pop %v1447
        %v1449 = vmul.f32 %v1393, 1.442695
        %v1450 = vpow.pop %v1449
        %v1451 = vmul.f32 %v1394, 1.442695
        %v1452 = vpow.pop %v1451
        %v1453 = vmul.f32 %v1395, 1.442695
        %v1454 = vpow.pop %v1453
        %v1455 = vmul.f32 %v1396, 1.442695
        %v1456 = vpow.pop %v1455
        %v1457 = vmul.f32 %v1397, 1.442695
        %v1458 = vpow.pop %v1457
        %v1459 = vmul.f32 %v1398, 1.442695
        %v1460 = vpow.pop %v1459
        %v1461 = vmul.f32 %v1399, 1.442695
        %v1462 = vpow.pop %v1461
        %v1463 = vmul.f32 %v1400, 1.442695
        %v1464 = vpow.pop %v1463
        %v1465 = vadd.f32 %v1402, %v1404
        %1466 = vadd.xlane.f32.xlu0 %v1465
        %v1467 = vpop.xlane.xlu0 %1466
        %v1468 = vadd.f32 %v1406, %v1408
        %1469 = vadd.xlane.f32.xlu0 %v1468
        %v1470 = vpop.xlane.xlu0 %1469
        %v1471 = vadd.f32 %v1410, %v1412
        %1472 = vadd.xlane.f32.xlu0 %v1471
        %v1473 = vpop.xlane.xlu0 %1472
        %v1474 = vadd.f32 %v1414, %v1416
        %1475 = vadd.xlane.f32.xlu0 %v1474
        %v1476 = vpop.xlane.xlu0 %1475
        %v1477 = vadd.f32 %v1418, %v1420
        %1478 = vadd.xlane.f32.xlu0 %v1477
        %v1479 = vpop.xlane.xlu0 %1478
        %v1480 = vadd.f32 %v1422, %v1424
        %1481 = vadd.xlane.f32.xlu0 %v1480
        %v1482 = vpop.xlane.xlu0 %1481
        %v1483 = vadd.f32 %v1426, %v1428
        %1484 = vadd.xlane.f32.xlu0 %v1483
        %v1485 = vpop.xlane.xlu0 %1484
        %v1486 = vadd.f32 %v1430, %v1432
        %1487 = vadd.xlane.f32.xlu0 %v1486
        %v1488 = vpop.xlane.xlu0 %1487
        %v1489 = vadd.f32 %v1434, %v1436
        %1490 = vadd.xlane.f32.xlu0 %v1489
        %v1491 = vpop.xlane.xlu0 %1490
        %v1492 = vadd.f32 %v1438, %v1440
        %1493 = vadd.xlane.f32.xlu0 %v1492
        %v1494 = vpop.xlane.xlu0 %1493
        %v1495 = vadd.f32 %v1442, %v1444
        %1496 = vadd.xlane.f32.xlu0 %v1495
        %v1497 = vpop.xlane.xlu0 %1496
        %v1498 = vadd.f32 %v1446, %v1448
        %1499 = vadd.xlane.f32.xlu0 %v1498
        %v1500 = vpop.xlane.xlu0 %1499
        %v1501 = vadd.f32 %v1450, %v1452
        %1502 = vadd.xlane.f32.xlu0 %v1501
        %v1503 = vpop.xlane.xlu0 %1502
        %v1504 = vadd.f32 %v1454, %v1456
        %1505 = vadd.xlane.f32.xlu0 %v1504
        %v1506 = vpop.xlane.xlu0 %1505
        %v1507 = vadd.f32 %v1458, %v1460
        %1508 = vadd.xlane.f32.xlu0 %v1507
        %v1509 = vpop.xlane.xlu0 %1508
        %v1510 = vadd.f32 %v1462, %v1464
        %1511 = vadd.xlane.f32.xlu0 %v1510
        %v1512 = vpop.xlane.xlu0 %1511
        %v1513 = vrcp.pop %v1467
        %v1514 = vrcp.pop %v1470
        %v1515 = vrcp.pop %v1473
        %v1516 = vrcp.pop %v1476
        %v1517 = vrcp.pop %v1479
        %v1518 = vrcp.pop %v1482
        %v1519 = vrcp.pop %v1485
        %v1520 = vrcp.pop %v1488
        %v1521 = vrcp.pop %v1491
        %v1522 = vrcp.pop %v1494
        %v1523 = vrcp.pop %v1497
        %v1524 = vrcp.pop %v1500
        %v1525 = vrcp.pop %v1503
        %v1526 = vrcp.pop %v1506
        %v1527 = vrcp.pop %v1509
        %v1528 = vrcp.pop %v1512
        %v1529 = vmul.f32 %v1402, %v1513
        %v1530 = vmul.f32 %v1404, %v1513
        %v1531 = vmul.f32 %v1406, %v1514
        %v1532 = vmul.f32 %v1408, %v1514
        %v1533 = vmul.f32 %v1410, %v1515
        %v1534 = vmul.f32 %v1412, %v1515
        %v1535 = vmul.f32 %v1414, %v1516
        %v1536 = vmul.f32 %v1416, %v1516
        %v1537 = vmul.f32 %v1418, %v1517
        %v1538 = vmul.f32 %v1420, %v1517
        %v1539 = vmul.f32 %v1422, %v1518
        %v1540 = vmul.f32 %v1424, %v1518
        %v1541 = vmul.f32 %v1426, %v1519
        %v1542 = vmul.f32 %v1428, %v1519
        %v1543 = vmul.f32 %v1430, %v1520
        %v1544 = vmul.f32 %v1432, %v1520
        %v1545 = vmul.f32 %v1434, %v1521
        %v1546 = vmul.f32 %v1436, %v1521
        %v1547 = vmul.f32 %v1438, %v1522
        %v1548 = vmul.f32 %v1440, %v1522
        %v1549 = vmul.f32 %v1442, %v1523
        %v1550 = vmul.f32 %v1444, %v1523
        %v1551 = vmul.f32 %v1446, %v1524
        %v1552 = vmul.f32 %v1448, %v1524
        %v1553 = vmul.f32 %v1450, %v1525
        %v1554 = vmul.f32 %v1452, %v1525
        %v1555 = vmul.f32 %v1454, %v1526
        %v1556 = vmul.f32 %v1456, %v1526
        %v1557 = vmul.f32 %v1458, %v1527
        %v1558 = vmul.f32 %v1460, %v1527
        %v1559 = vmul.f32 %v1462, %v1528
        %v1560 = vmul.f32 %v1464, %v1528
        %v1561 = vpack.c.bf16 %v1531, %v1529
        %v1562 = vpack.c.bf16 %v1532, %v1530
        %v1563 = vpack.c.bf16 %v1535, %v1533
        %v1564 = vpack.c.bf16 %v1536, %v1534
        %v1565 = vpack.c.bf16 %v1539, %v1537
        %v1566 = vpack.c.bf16 %v1540, %v1538
        %v1567 = vpack.c.bf16 %v1543, %v1541
        %v1568 = vpack.c.bf16 %v1544, %v1542
        %v1569 = vpack.c.bf16 %v1547, %v1545
        %v1570 = vpack.c.bf16 %v1548, %v1546
        %v1571 = vpack.c.bf16 %v1551, %v1549
        %v1572 = vpack.c.bf16 %v1552, %v1550
        %v1573 = vpack.c.bf16 %v1555, %v1553
        %v1574 = vpack.c.bf16 %v1556, %v1554
        %v1575 = vpack.c.bf16 %v1559, %v1557
        %v1576 = vpack.c.bf16 %v1560, %v1558
        %s1577 = smul.u32 %s25, 128
        %s1578 = sshra.s32 %s1577, 7
        %s1579 = sand.u32 %s1577, 127
        %s1580 = smul.addr %s1578, 8
        %s1581 = scalar_lea.vmem [#allocation3], %s1580
        %v1582 = vld [vmem:[%s1581] sm:$0xff]
        %v1583 = vld [vmem:[%s1581 + $0x10] sm:$0xff]
        %v1584 = vld [vmem:[%s1581 + $0x20] sm:$0xff]
        %v1585 = vld [vmem:[%s1581 + $0x30] sm:$0xff]
        %v1586 = vld [vmem:[%s1581 + $0x40] sm:$0xff]
        %v1587 = vld [vmem:[%s1581 + $0x50] sm:$0xff]
        %v1588 = vld [vmem:[%s1581 + $0x60] sm:$0xff]
        %v1589 = vld [vmem:[%s1581 + $0x70] sm:$0xff]
        %v1590 = vld [vmem:[%s282] sm:$0xff]
        %v1591 = vld [vmem:[%s282 + $0x8] sm:$0xff]
        %v1592 = vld [vmem:[%s282 + $0x10] sm:$0xff]
        %v1593 = vld [vmem:[%s282 + $0x18] sm:$0xff]
        %v1594 = vld [vmem:[%s282 + $0x20] sm:$0xff]
        %v1595 = vld [vmem:[%s282 + $0x28] sm:$0xff]
        %v1596 = vld [vmem:[%s282 + $0x30] sm:$0xff]
        %v1597 = vld [vmem:[%s282 + $0x38] sm:$0xff]
        %v1598 = vld [vmem:[%s282 + $0x40] sm:$0xff]
        %v1599 = vld [vmem:[%s282 + $0x48] sm:$0xff]
        %v1600 = vld [vmem:[%s282 + $0x50] sm:$0xff]
        %v1601 = vld [vmem:[%s282 + $0x58] sm:$0xff]
        %v1602 = vld [vmem:[%s282 + $0x60] sm:$0xff]
        %v1603 = vld [vmem:[%s282 + $0x68] sm:$0xff]
        %v1604 = vld [vmem:[%s282 + $0x70] sm:$0xff]
        %v1605 = vld [vmem:[%s282 + $0x78] sm:$0xff]
        %v1606 = vld [vmem:[%s282 + $0x80] sm:$0xff]
        %v1607 = vld [vmem:[%s282 + $0x88] sm:$0xff]
        %v1608 = vld [vmem:[%s282 + $0x90] sm:$0xff]
        %v1609 = vld [vmem:[%s282 + $0x98] sm:$0xff]
        %v1610 = vld [vmem:[%s282 + $0xa0] sm:$0xff]
        %v1611 = vld [vmem:[%s282 + $0xa8] sm:$0xff]
        %v1612 = vld [vmem:[%s282 + $0xb0] sm:$0xff]
        %v1613 = vld [vmem:[%s282 + $0xb8] sm:$0xff]
        %v1614 = vld [vmem:[%s282 + $0xc0] sm:$0xff]
        %v1615 = vld [vmem:[%s282 + $0xc8] sm:$0xff]
        %v1616 = vld [vmem:[%s282 + $0xd0] sm:$0xff]
        %v1617 = vld [vmem:[%s282 + $0xd8] sm:$0xff]
        %v1618 = vld [vmem:[%s282 + $0xe0] sm:$0xff]
        %v1619 = vld [vmem:[%s282 + $0xe8] sm:$0xff]
        %v1620 = vld [vmem:[%s282 + $0xf0] sm:$0xff]
        %v1621 = vld [vmem:[%s282 + $0xf8] sm:$0xff]
        %1622 = vmatprep.subr.bf16.mxu0 %v1562
        %1623 = vmatpush1.bf16.msra.mxu0 %v1561
        %1624 = vmatprep.subr.bf16.mxu0 %v1564
        %1625 = vmatpush1.bf16.msra.mxu0 %v1563
        %1626 = vmatprep.subr.bf16.mxu0 %v1566
        %1627 = vmatpush1.bf16.msra.mxu0 %v1565
        %1628 = vmatprep.subr.bf16.mxu0 %v1568
        %1629 = vmatpush1.bf16.msra.mxu0 %v1567
        %1630 = vmatprep.subr.bf16.mxu0 %v1570
        %1631 = vmatpush1.bf16.msra.mxu0 %v1569
        %1632 = vmatprep.subr.bf16.mxu0 %v1572
        %1633 = vmatpush1.bf16.msra.mxu0 %v1571
        %1634 = vmatprep.subr.bf16.mxu0 %v1574
        %1635 = vmatpush1.bf16.msra.mxu0 %v1573
        %1636 = vmatprep.subr.bf16.mxu0 %v1576
        %1637 = vmatpush1.bf16.msra.mxu0 %v1575
        %1638 = vmatprep.subr.bf16.mxu0 0
        %1639 = vmatpush1.bf16.msra.mxu0 0
        %1640 = vmatprep.subr.bf16.mxu0 0
        %1641 = vmatpush1.bf16.msra.mxu0 0
        %1642 = vmatprep.subr.bf16.mxu0 0
        %1643 = vmatpush1.bf16.msra.mxu0 0
        %1644 = vmatprep.subr.bf16.mxu0 0
        %1645 = vmatpush1.bf16.msra.mxu0 0
        %1646 = vmatprep.subr.bf16.mxu0 0
        %1647 = vmatpush1.bf16.msra.mxu0 0
        %1648 = vmatprep.subr.bf16.mxu0 0
        %1649 = vmatpush1.bf16.msra.mxu0 0
        %1650 = vmatprep.subr.bf16.mxu0 0
        %1651 = vmatpush1.bf16.msra.mxu0 0
        %1652 = vmatprep.subr.bf16.mxu0 0
        %1653 = vmatpush1.bf16.msra.mxu0 0
        %1654 = vmatprep.mubr.bf16.mxu0 0
        %1655 = vmatmul.mubr.bf16.gmra.mrb[0].mxu0 %v1582
        %v1656 = vpop.f32.mrb[0].mxu0
        %v1657 = vadd.f32 0.0, %v1656
        %v1658 = vpop.f32.mrb[0].mxu0
        %v1659 = vadd.f32 0.0, %v1658
        %v1660 = vpop.f32.mrb[0].mxu0
        %v1661 = vadd.f32 0.0, %v1660
        %v1662 = vpop.f32.mrb[0].mxu0
        %v1663 = vadd.f32 0.0, %v1662
        %1664 = vmatprep.mubr.bf16.mxu0 0
        %1665 = vmatmul.mubr.bf16.gmra.mrb[0].mxu0 %v1583
        %v1666 = vpop.f32.mrb[0].mxu0
        %v1667 = vadd.f32 0.0, %v1666
        %v1668 = vpop.f32.mrb[0].mxu0
        %v1669 = vadd.f32 0.0, %v1668
        %v1670 = vpop.f32.mrb[0].mxu0
        %v1671 = vadd.f32 0.0, %v1670
        %v1672 = vpop.f32.mrb[0].mxu0
        %v1673 = vadd.f32 0.0, %v1672
        %1674 = vmatprep.mubr.bf16.mxu0 0
        %1675 = vmatmul.mubr.bf16.gmra.mrb[0].mxu0 %v1584
        %v1676 = vpop.f32.mrb[0].mxu0
        %v1677 = vadd.f32 0.0, %v1676
        %v1678 = vpop.f32.mrb[0].mxu0
        %v1679 = vadd.f32 0.0, %v1678
        %v1680 = vpop.f32.mrb[0].mxu0
        %v1681 = vadd.f32 0.0, %v1680
        %v1682 = vpop.f32.mrb[0].mxu0
        %v1683 = vadd.f32 0.0, %v1682
        %1684 = vmatprep.mubr.bf16.mxu0 0
        %1685 = vmatmul.mubr.bf16.gmra.mrb[0].mxu0 %v1585
        %v1686 = vpop.f32.mrb[0].mxu0
        %v1687 = vadd.f32 0.0, %v1686
        %v1688 = vpop.f32.mrb[0].mxu0
        %v1689 = vadd.f32 0.0, %v1688
        %v1690 = vpop.f32.mrb[0].mxu0
        %v1691 = vadd.f32 0.0, %v1690
        %v1692 = vpop.f32.mrb[0].mxu0
        %v1693 = vadd.f32 0.0, %v1692
        %1694 = vmatprep.mubr.bf16.mxu0 0
        %1695 = vmatmul.mubr.bf16.gmra.mrb[0].mxu0 %v1586
        %v1696 = vpop.f32.mrb[0].mxu0
        %v1697 = vadd.f32 0.0, %v1696
        %v1698 = vpop.f32.mrb[0].mxu0
        %v1699 = vadd.f32 0.0, %v1698
        %v1700 = vpop.f32.mrb[0].mxu0
        %v1701 = vadd.f32 0.0, %v1700
        %v1702 = vpop.f32.mrb[0].mxu0
        %v1703 = vadd.f32 0.0, %v1702
        %1704 = vmatprep.mubr.bf16.mxu0 0
        %1705 = vmatmul.mubr.bf16.gmra.mrb[0].mxu0 %v1587
        %v1706 = vpop.f32.mrb[0].mxu0
        %v1707 = vadd.f32 0.0, %v1706
        %v1708 = vpop.f32.mrb[0].mxu0
        %v1709 = vadd.f32 0.0, %v1708
        %v1710 = vpop.f32.mrb[0].mxu0
        %v1711 = vadd.f32 0.0, %v1710
        %v1712 = vpop.f32.mrb[0].mxu0
        %v1713 = vadd.f32 0.0, %v1712
        %1714 = vmatprep.mubr.bf16.mxu0 0
        %1715 = vmatmul.mubr.bf16.gmra.mrb[0].mxu0 %v1588
        %v1716 = vpop.f32.mrb[0].mxu0
        %v1717 = vadd.f32 0.0, %v1716
        %v1718 = vpop.f32.mrb[0].mxu0
        %v1719 = vadd.f32 0.0, %v1718
        %v1720 = vpop.f32.mrb[0].mxu0
        %v1721 = vadd.f32 0.0, %v1720
        %v1722 = vpop.f32.mrb[0].mxu0
        %v1723 = vadd.f32 0.0, %v1722
        %1724 = vmatprep.mubr.bf16.mxu0 0
        %1725 = vmatmul.mubr.bf16.gmra.mrb[0].mxu0 %v1589
        %v1726 = vpop.f32.mrb[0].mxu0
        %v1727 = vadd.f32 0.0, %v1726
        %v1728 = vpop.f32.mrb[0].mxu0
        %v1729 = vadd.f32 0.0, %v1728
        %v1730 = vpop.f32.mrb[0].mxu0
        %v1731 = vadd.f32 0.0, %v1730
        %v1732 = vpop.f32.mrb[0].mxu0
        %v1733 = vadd.f32 0.0, %v1732
        %1734 = vdwg.mxu0
        %v1735 = vadd.f32 %v1590, %v1657
        %v1736 = vadd.f32 %v1591, %v1659
        %v1737 = vadd.f32 %v1592, %v1661
        %v1738 = vadd.f32 %v1593, %v1663
        %v1739 = vadd.f32 %v1594, %v1667
        %v1740 = vadd.f32 %v1595, %v1669
        %v1741 = vadd.f32 %v1596, %v1671
        %v1742 = vadd.f32 %v1597, %v1673
        %v1743 = vadd.f32 %v1598, %v1677
        %v1744 = vadd.f32 %v1599, %v1679
        %v1745 = vadd.f32 %v1600, %v1681
        %v1746 = vadd.f32 %v1601, %v1683
        %v1747 = vadd.f32 %v1602, %v1687
        %v1748 = vadd.f32 %v1603, %v1689
        %v1749 = vadd.f32 %v1604, %v1691
        %v1750 = vadd.f32 %v1605, %v1693
        %v1751 = vadd.f32 %v1606, %v1697
        %v1752 = vadd.f32 %v1607, %v1699
        %v1753 = vadd.f32 %v1608, %v1701
        %v1754 = vadd.f32 %v1609, %v1703
        %v1755 = vadd.f32 %v1610, %v1707
        %v1756 = vadd.f32 %v1611, %v1709
        %v1757 = vadd.f32 %v1612, %v1711
        %v1758 = vadd.f32 %v1613, %v1713
        %v1759 = vadd.f32 %v1614, %v1717
        %v1760 = vadd.f32 %v1615, %v1719
        %v1761 = vadd.f32 %v1616, %v1721
        %v1762 = vadd.f32 %v1617, %v1723
        %v1763 = vadd.f32 %v1618, %v1727
        %v1764 = vadd.f32 %v1619, %v1729
        %v1765 = vadd.f32 %v1620, %v1731
        %v1766 = vadd.f32 %v1621, %v1733
        %1767 = vst [vmem:[%s282] sm:$0xff] %v1735
        %1768 = vst [vmem:[%s282 + $0x8] sm:$0xff] %v1736
        %1769 = vst [vmem:[%s282 + $0x10] sm:$0xff] %v1737
        %1770 = vst [vmem:[%s282 + $0x18] sm:$0xff] %v1738
        %1771 = vst [vmem:[%s282 + $0x20] sm:$0xff] %v1739
        %1772 = vst [vmem:[%s282 + $0x28] sm:$0xff] %v1740
        %1773 = vst [vmem:[%s282 + $0x30] sm:$0xff] %v1741
        %1774 = vst [vmem:[%s282 + $0x38] sm:$0xff] %v1742
        %1775 = vst [vmem:[%s282 + $0x40] sm:$0xff] %v1743
        %1776 = vst [vmem:[%s282 + $0x48] sm:$0xff] %v1744
        %1777 = vst [vmem:[%s282 + $0x50] sm:$0xff] %v1745
        %1778 = vst [vmem:[%s282 + $0x58] sm:$0xff] %v1746
        %1779 = vst [vmem:[%s282 + $0x60] sm:$0xff] %v1747
        %1780 = vst [vmem:[%s282 + $0x68] sm:$0xff] %v1748
        %1781 = vst [vmem:[%s282 + $0x70] sm:$0xff] %v1749
        %1782 = vst [vmem:[%s282 + $0x78] sm:$0xff] %v1750
        %1783 = vst [vmem:[%s282 + $0x80] sm:$0xff] %v1751
        %1784 = vst [vmem:[%s282 + $0x88] sm:$0xff] %v1752
        %1785 = vst [vmem:[%s282 + $0x90] sm:$0xff] %v1753
        %1786 = vst [vmem:[%s282 + $0x98] sm:$0xff] %v1754
        %1787 = vst [vmem:[%s282 + $0xa0] sm:$0xff] %v1755
        %1788 = vst [vmem:[%s282 + $0xa8] sm:$0xff] %v1756
        %1789 = vst [vmem:[%s282 + $0xb0] sm:$0xff] %v1757
        %1790 = vst [vmem:[%s282 + $0xb8] sm:$0xff] %v1758
        %1791 = vst [vmem:[%s282 + $0xc0] sm:$0xff] %v1759
        %1792 = vst [vmem:[%s282 + $0xc8] sm:$0xff] %v1760
        %1793 = vst [vmem:[%s282 + $0xd0] sm:$0xff] %v1761
        %1794 = vst [vmem:[%s282 + $0xd8] sm:$0xff] %v1762
        %1795 = vst [vmem:[%s282 + $0xe0] sm:$0xff] %v1763
        %1796 = vst [vmem:[%s282 + $0xe8] sm:$0xff] %v1764
        %1797 = vst [vmem:[%s282 + $0xf0] sm:$0xff] %v1765
        %1798 = vst [vmem:[%s282 + $0xf8] sm:$0xff] %v1766
        %s1799 = sand.u32 %s178, 1
        %s1800 = scalar_lea.sflag [#allocation5], %s1799
        %s1801 = sand.u32 %s178, 1
        %s1802 = smul.addr %s1801, 256
        %s1803 = scalar_lea.vmem [#allocation4], %s1802
        // Predicated region
        $region49: #{tpu_custom_call.1} parent=43 // pred_check
          %p1804 = pneg %p188
        $region50: #{tpu_custom_call.1} parent=43 // pred_check_branch
          %1806 = sbr.rel (%p1804) target = $region52
        $region51: #{tpu_custom_call.1} parent=43 // pred_region
          %s1808 = ssub.s32 4096, 4096
          %1809 = vsyncadd %s1800, %s1808
          %s1810 = smul.addr %s24, 32
          %s1811 = smul.addr %s1810, 128
          %s1812 = scalar_lea.hbm %s6, %s1811
          %s1813 = sshll.u32 %s1803, 4
          %s1814 = int_to_ptr.vmem [resolvable:$true] %s1813
          %1819 = dma.vmem_to_hbm [thread:$0]  %s1814, 4096, %s1812, %s1800, 256, 256, 16
        $region52: #{tpu_custom_call.1} parent=43 // pred_fallthru
          _
      $region44: #{tpu_custom_call.1} parent=5 // pred_fallthru
        _
      %p1820 = scmp.le.s32.totalorder 2, %s15
      // Predicated region
      $region53: #{tpu_custom_call.1} parent=5 // pred_check
        %p1821 = pneg %p1820
      $region54: #{tpu_custom_call.1} parent=5 // pred_check_branch
        %1823 = sbr.rel (%p1821) target = $region56
      $region55: #{tpu_custom_call.1} parent=5 // pred_region
        %s1824 = ssub.s32 %s15, 2
        // Predicated region
        $region57: #{tpu_custom_call.1} parent=55 // pred_check
          %p1825 = pneg %p194
        $region58: #{tpu_custom_call.1} parent=55 // pred_check_branch
          %1827 = sbr.rel (%p1825) target = $region60
        $region59: #{tpu_custom_call.1} parent=55 // pred_region
          %s1828 = sand.u32 %s179, 1
          %s1829 = scalar_lea.sflag [#allocation5], %s1828
          %s1830 = sand.u32 %s179, 1
          %s1831 = smul.addr %s1830, 256
          %s1832 = scalar_lea.vmem [#allocation4], %s1831
          %1833 = dma.done %s1829, 4096
        $region60: #{tpu_custom_call.1} parent=55 // pred_fallthru
          _
      $region56: #{tpu_custom_call.1} parent=5 // pred_fallthru
        _
    $region6: #{tpu_custom_call.1} parent=1 // loop_footer
      %s19 = sadd.s32 1, %s15
    $region7: #{tpu_custom_call.1} parent=1 // loop_footer_branch
      %14 = sbr.rel target = $region3
    $region8: #{tpu_custom_call.1} parent=1 // loop_exit
      _
    %1834 = vsyncpa [#allocation5], 1
    %s1835 = scalar_lea.sflag [#allocation5], 1
    %1836 = vsyncpa %s1835, 1

</llo_original>
